<compile_context>
chip_gen: v7x
topology: tpu7x:2x2x1
jax: 0.10.0
libtpu: 0.0.40
codegen_flags: <defaults>
</compile_context>

<pallas_src>
import jax
import jax.numpy as jnp
from jax import lax
from jax.experimental import pallas as pl
from jax.experimental.pallas import tpu as pltpu


def lstm2_kernel(xproj_ref,     # (T, Nb, 4H) bf16  precomputed x@Wih^T + b_ih + b_hh (gate order i,f,o,g)
                 whh_t_ref,     # (H, 4H)  bf16     LSTM recurrent weights (transposed, i,f,o,g)
                 wa_ref,        # (H, 1)   bf16     precomposed attn weight acting on out_t
                 wb_ref,        # (H, 1)   bf16     precomposed attn weight acting on B (= last h)
                 be_ref,        # (1, 1)   f32      precomposed attn bias
                 wd1_t_ref,     # (H, 200) bf16     decoder Linear1
                 bd1_ref,       # (1, 200) f32
                 wd2_t_ref,     # (200, O) bf16     decoder Linear2
                 bd2_ref,       # (1, O)   f32
                 out_ref,       # (Nb, O)  f32
                 c_scr,         # (Nb, H)  f32      cell state
                 seq_scr):      # (T, Nb, H) bf16   all hidden states
    T, N, _ = xproj_ref.shape
    H = whh_t_ref.shape[0]

    whh_t = whh_t_ref[...]                          # hoisted: resident bf16 (H, 4H)

    def cell(gates, c):                             # gates f32 (N, 4H), c f32
        sg = jax.nn.sigmoid(gates[:, :3 * H])       # i | f | o in one EUP pass
        gg = jnp.tanh(gates[:, 3 * H:])             # g
        c_new = sg[:, H:2 * H] * c + sg[:, :H] * gg
        h_new = sg[:, 2 * H:3 * H] * jnp.tanh(c_new)
        return h_new, c_new

    # ---- t = 0: h_{-1} = c_{-1} = 0, so the gates are just the (bias-carrying) projection ----
    h0, c0 = cell(xproj_ref[0].astype(jnp.float32), 0.0)
    c_scr[...] = c0
    h0_bf = h0.astype(seq_scr.dtype)
    seq_scr[0] = h0_bf

    # ---- LSTM recurrence, fully unrolled; h carried in vregs (bf16), c in f32 scratch ----
    def step(t, h_prev):
        gates = xproj_ref[t].astype(jnp.float32) + jnp.dot(
            h_prev, whh_t, preferred_element_type=jnp.float32)          # (N, 4H) f32
        h_new, c_new = cell(gates, c_scr[...])
        c_scr[...] = c_new
        h_bf = h_new.astype(seq_scr.dtype)
        seq_scr[t] = h_bf
        return h_bf

    last_h = lax.fori_loop(1, T, step, h0_bf, unroll=True)              # (N, H) bf16

    # ---- attention scores (precomposed Linear(2H,128) -> Linear(128,1), no activation) ----
    seq_all = seq_scr[...]                                              # (T, N, H) bf16
    seq_flat = seq_all.reshape(T * N, H)
    const = jnp.dot(last_h, wb_ref[...],
                    preferred_element_type=jnp.float32) + be_ref[...]   # (N, 1)
    score = (jnp.dot(seq_flat, wa_ref[...],
                     preferred_element_type=jnp.float32)
             .reshape(T, N, 1) + const[None, :, :])                     # (T, N, 1)

    # ---- softmax over time (leading axis; PyTorch dim=1 on (N, T)) ----
    m = jnp.max(score, axis=0, keepdims=True)
    e = jnp.exp(score - m)
    w = e * pl.reciprocal(jnp.sum(e, axis=0, keepdims=True), approx=True)

    # ---- attention-weighted sum over time (bmm equivalent), f32 accumulation ----
    ctx = jnp.sum(w * seq_all.astype(jnp.float32), axis=0)              # (N, H) f32

    # ---- decoder: Linear(H->200) -> Dropout(identity, eval) -> Linear(200->O) -> Sigmoid ----
    d1 = jnp.dot(ctx.astype(jnp.bfloat16), wd1_t_ref[...],
                 preferred_element_type=jnp.float32) + bd1_ref[...]
    logits = jax.nn.sigmoid(
        jnp.dot(d1.astype(jnp.bfloat16), wd2_t_ref[...],
                preferred_element_type=jnp.float32) + bd2_ref[...])
    out_ref[...] = logits.astype(out_ref.dtype)


def lstm2_forward(x, params, n_blk=None):
    """x: (b, s, E, wsize)  ->  (b, s * output_size), like LSTM2.forward (eval mode)."""
    b, s, E, T = x.shape
    N = b * s
    H = params["whh_t"].shape[0]
    O = params["wd2_t"].shape[1]

    # Generation-dependent sizing (v7x has 64 MiB VMEM per TensorCore, v5e/v6e have 128 MiB).
    try:
        vmem_cap = getattr(pltpu.get_tpu_info(), "vmem_capacity_bytes", 64 << 20)
    except Exception:
        vmem_cap = 64 << 20
    big_vmem = vmem_cap >= (96 << 20)

    # PyTorch: view(-1, E, wsize) -> permute(0, 2, 1) gives (N, T, E); kernel is time-major.
    x_tne = jnp.transpose(x.reshape(N, E, T), (2, 0, 1)).astype(jnp.float32)    # (T, N, E)

    # Hoisted input projection (removes the 32x lane-padded E-wide input block and the
    # (T, n_blk, 4H) in-kernel scratch): gates_x = x @ Wih^T + (b_ih + b_hh), fed as bf16.
    xproj = (jnp.einsum("tne,eg->tng", x_tne, params["wih_t"])
             + params["b"]).astype(jnp.bfloat16)                                # (T, N, 4H)

    # Block over the flattened batch: multiple of 8 sublanes; always >= 2 grid blocks when
    # N allows (so both v7x TensorCores get work); cap scales with VMEM capacity.
    if n_blk is None:
        cap = 2048 if big_vmem else 512
        n_blk = min(cap, max(8, -(-N // 2)))
    n_blk = max(8, ((n_blk + 7) // 8) * 8)
    n_pad = -(-N // n_blk) * n_blk
    if n_pad != N:
        xproj = jnp.pad(xproj, ((0, 0), (0, n_pad - N), (0, 0)))   # padded rows -> finite garbage, sliced off

    weight_names = ["whh_t", "wa", "wb", "be", "wd1_t", "bd1", "wd2_t", "bd2"]
    weights = [params[k] for k in weight_names]

    def resident(arr):
        # Full-array block with a constant index map: stays VMEM-resident across the grid.
        return pl.BlockSpec(arr.shape, lambda i: (0, 0))

    grid_spec = pltpu.PrefetchScalarGridSpec(
        num_scalar_prefetch=0,
        grid=(n_pad // n_blk,),
        in_specs=[pl.BlockSpec((T, n_blk, 4 * H), lambda i: (0, i, 0))]
                 + [resident(w) for w in weights],
        out_specs=pl.BlockSpec((n_blk, O), lambda i: (i, 0)),
        scratch_shapes=[
            pltpu.VMEM((n_blk, H), jnp.float32),          # c state (f32 for recurrence stability)
            pltpu.VMEM((T, n_blk, H), jnp.bfloat16),      # all hidden states
        ],
    )

    out = pl.pallas_call(
        lstm2_kernel,
        out_shape=jax.ShapeDtypeStruct((n_pad, O), jnp.float32),
        grid_spec=grid_spec,
        compiler_params=pltpu.CompilerParams(
            dimension_semantics=("parallel",),            # independent sequences; megacore-shardable
            vmem_limit_bytes=(100 << 20) if big_vmem else (48 << 20)),
    )(xproj, *weights)
    return out[:N].reshape(b, s * O)


def init_params(key, E, H, O, gain=1.0):
    """Deterministic synthetic parameters matching the PyTorch module's shapes."""
    def xavier(k, shape, g):
        fan_out, fan_in = shape
        std = g * (2.0 / (fan_in + fan_out)) ** 0.5
        return std * jax.random.normal(k, shape, dtype=jnp.float32)

    def unif(k, shape, fan_in):
        bound = 1.0 / (fan_in ** 0.5)
        return jax.random.uniform(k, shape, minval=-bound, maxval=bound,
                                  dtype=jnp.float32)

    ks = jax.random.split(key, 12)
    wih = xavier(ks[0], (4 * H, E), gain)       # encoder weight_ih_l0 (PyTorch gate order i,f,g,o)
    whh = xavier(ks[1], (4 * H, H), gain)       # encoder weight_hh_l0
    b_ih = unif(ks[2], (4 * H,), H)
    b_hh = unif(ks[3], (4 * H,), H)
    w1 = xavier(ks[4], (128, 2 * H), gain)      # attn Linear(2H, 128)
    b1 = unif(ks[5], (128,), 2 * H)
    w2 = xavier(ks[6], (1, 128), gain)          # attn Linear(128, 1)
    b2 = unif(ks[7], (1,), 128)
    wd1 = xavier(ks[8], (200, H), gain)         # decoder Linear(H, 200)
    bd1 = unif(ks[9], (200,), H)
    wd2 = xavier(ks[10], (O, 200), gain)        # decoder Linear(200, O)
    bd2 = unif(ks[11], (O,), 200)

    # Reorder LSTM gate rows from PyTorch (i, f, g, o) to kernel layout (i, f, o, g) so
    # one sigmoid covers the first 3H gate columns and one tanh covers the last H.
    # NOTE: real PyTorch checkpoints must get the same row permutation applied.
    perm = jnp.concatenate([jnp.arange(0, 2 * H),
                            jnp.arange(3 * H, 4 * H),
                            jnp.arange(2 * H, 3 * H)])
    wih_r = wih[perm]
    whh_r = whh[perm]
    bias_r = (b_ih + b_hh)[perm]

    # Precompose the activation-free attention MLP:
    #   score = cat(out, B) @ W1^T @ W2^T + (b1 @ W2^T + b2)
    wa = w1[:, :H].T @ w2.T                             # (H, 1) acts on out_t
    wb = w1[:, H:].T @ w2.T                             # (H, 1) acts on B (= last hidden)
    be = b1.reshape(1, 128) @ w2.T + b2.reshape(1, 1)   # (1, 1)

    bf = jnp.bfloat16
    return {
        # used by the wrapper's hoisted projection (kept f32 for accuracy)
        "wih_t": wih_r.T,                        # (E, 4H)
        "b": bias_r.reshape(1, 4 * H),           # (1, 4H)
        # kernel-resident weights (matmul datapath bf16, biases f32)
        "whh_t": whh_r.T.astype(bf),             # (H, 4H)
        "wa": wa.astype(bf),                     # (H, 1)
        "wb": wb.astype(bf),                     # (H, 1)
        "be": be,                                # (1, 1)
        "wd1_t": wd1.T.astype(bf),               # (H, 200)
        "bd1": bd1.reshape(1, 200),              # (1, 200)
        "wd2_t": wd2.T.astype(bf),               # (200, O)
        "bd2": bd2.reshape(1, O),                # (1, O)
    }


if __name__ == "__main__":
    # b=batch, s=windows per sample, E=enc_input_size, T=wsize, H=input_size/hidden, O=output_size
    b, s, E, T = 2, 8, 4, 8
    H, O = 32, 8
    key = jax.random.PRNGKey(0)
    kx, kp = jax.random.split(key)

    x = jax.random.normal(kx, (b, s, E, T), dtype=jnp.float32)
    params = init_params(kp, E, H, O, gain=1.0)

    # Default sizing -> n_blk=8, grid of 2 parallel blocks over N=b*s=16 (exercises tiling).
    out = lstm2_forward(x, params)
    out = jax.block_until_ready(out)
    assert out.shape == (b, s * O), out.shape
    assert bool(jnp.all(jnp.isfinite(out)))
    print("KERNEL_OK")
</pallas_src>

<mosaic_0001>
module attributes {stable_mosaic.version = 11 : i64} {
  func.func @lstm2_kernel(%arg0: i32, %arg1: memref<8x8x128xbf16, #tpu.memory_space<vmem>>, %arg2: memref<32x128xbf16, #tpu.memory_space<vmem>>, %arg3: memref<32x1xbf16, #tpu.memory_space<vmem>>, %arg4: memref<32x1xbf16, #tpu.memory_space<vmem>>, %arg5: memref<1x1xf32, #tpu.memory_space<vmem>>, %arg6: memref<32x200xbf16, #tpu.memory_space<vmem>>, %arg7: memref<1x200xf32, #tpu.memory_space<vmem>>, %arg8: memref<200x8xbf16, #tpu.memory_space<vmem>>, %arg9: memref<1x8xf32, #tpu.memory_space<vmem>>, %arg10: memref<8x8xf32, #tpu.memory_space<vmem>>, %arg11: memref<8x32xf32, #tpu.memory_space<vmem>>, %arg12: memref<8x8x32xbf16, #tpu.memory_space<vmem>>) attributes {dimension_semantics = [#tpu.dimension_semantics<parallel>], iteration_bounds = array<i64: 2>, scalar_prefetch = 0 : i64, scratch_operands = 2 : i64, tpu.core_type = #tpu.core_type<tc>, window_params = [{transform_indices = @transform_0, window_bounds = array<i64: 8, 8, 128>}, {pipeline_mode = #tpu.pipeline_mode<synchronous>, transform_indices = @transform_1, window_bounds = array<i64: 32, 128>}, {pipeline_mode = #tpu.pipeline_mode<synchronous>, transform_indices = @transform_2, window_bounds = array<i64: 32, 1>}, {pipeline_mode = #tpu.pipeline_mode<synchronous>, transform_indices = @transform_3, window_bounds = array<i64: 32, 1>}, {pipeline_mode = #tpu.pipeline_mode<synchronous>, transform_indices = @transform_4, window_bounds = array<i64: 1, 1>}, {pipeline_mode = #tpu.pipeline_mode<synchronous>, transform_indices = @transform_5, window_bounds = array<i64: 32, 200>}, {pipeline_mode = #tpu.pipeline_mode<synchronous>, transform_indices = @transform_6, window_bounds = array<i64: 1, 200>}, {pipeline_mode = #tpu.pipeline_mode<synchronous>, transform_indices = @transform_7, window_bounds = array<i64: 200, 8>}, {pipeline_mode = #tpu.pipeline_mode<synchronous>, transform_indices = @transform_8, window_bounds = array<i64: 1, 8>}, {transform_indices = @transform_9, window_bounds = array<i64: 8, 8>}]} {
    %c0 = arith.constant 0 : index
    %c0_0 = arith.constant 0 : index
    %0 = vector.load %arg2[%c0, %c0_0] : memref<32x128xbf16, #tpu.memory_space<vmem>>, vector<32x128xbf16>
    %c0_1 = arith.constant 0 : index
    %c0_2 = arith.constant 0 : index
    %c0_3 = arith.constant 0 : index
    %1 = vector.load %arg1[%c0_1, %c0_2, %c0_3] : memref<8x8x128xbf16, #tpu.memory_space<vmem>>, vector<1x8x128xbf16>
    %2 = vector.shape_cast %1 : vector<1x8x128xbf16> to vector<8x128xbf16>
    %3 = arith.extf %2 : vector<8x128xbf16> to vector<8x128xf32>
    %4 = vector.extract_strided_slice %3 {offsets = [0, 0], sizes = [8, 96], strides = [1, 1]} : vector<8x128xf32> to vector<8x96xf32>
    %5 = arith.negf %4 : vector<8x96xf32>
    %6 = math.exp %5 : vector<8x96xf32>
    %cst = arith.constant 1.000000e+00 : f32
    %7 = vector.broadcast %cst : f32 to vector<8x96xf32>
    %8 = arith.addf %7, %6 : vector<8x96xf32>
    %9 = arith.divf %7, %8 : vector<8x96xf32>
    %10 = vector.extract_strided_slice %3 {offsets = [0, 96], sizes = [8, 32], strides = [1, 1]} : vector<8x128xf32> to vector<8x32xf32>
    %11 = math.tanh %10 : vector<8x32xf32>
    %12 = vector.extract_strided_slice %9 {offsets = [0, 32], sizes = [8, 32], strides = [1, 1]} : vector<8x96xf32> to vector<8x32xf32>
    %cst_4 = arith.constant 0.000000e+00 : f32
    %13 = vector.broadcast %cst_4 : f32 to vector<8x32xf32>
    %14 = arith.mulf %12, %13 : vector<8x32xf32>
    %15 = vector.extract_strided_slice %9 {offsets = [0, 0], sizes = [8, 32], strides = [1, 1]} : vector<8x96xf32> to vector<8x32xf32>
    %16 = arith.mulf %15, %11 : vector<8x32xf32>
    %17 = arith.addf %14, %16 : vector<8x32xf32>
    %18 = vector.extract_strided_slice %9 {offsets = [0, 64], sizes = [8, 32], strides = [1, 1]} : vector<8x96xf32> to vector<8x32xf32>
    %19 = math.tanh %17 : vector<8x32xf32>
    %20 = arith.mulf %18, %19 : vector<8x32xf32>
    %c0_5 = arith.constant 0 : index
    %c0_6 = arith.constant 0 : index
    %21 = vector.load %arg11[%c0_5, %c0_6] : memref<8x32xf32, #tpu.memory_space<vmem>>, vector<8x32xf32>
    tpu.vector_store %arg11[%c0_5, %c0_6], %17 {strides = array<i32>} : memref<8x32xf32, #tpu.memory_space<vmem>>, vector<8x32xf32>,
    %22 = arith.truncf %20 : vector<8x32xf32> to vector<8x32xbf16>
    %c0_7 = arith.constant 0 : index
    %c0_8 = arith.constant 0 : index
    %c0_9 = arith.constant 0 : index
    %23 = vector.load %arg12[%c0_7, %c0_8, %c0_9] : memref<8x8x32xbf16, #tpu.memory_space<vmem>>, vector<1x8x32xbf16>
    %24 = vector.shape_cast %23 : vector<1x8x32xbf16> to vector<8x32xbf16>
    %25 = vector.shape_cast %22 : vector<8x32xbf16> to vector<1x8x32xbf16>
    tpu.vector_store %arg12[%c0_7, %c0_8, %c0_9], %25 {strides = array<i32>} : memref<8x8x32xbf16, #tpu.memory_space<vmem>>, vector<1x8x32xbf16>,
    %c1_i32 = arith.constant 1 : i32
    %26 = arith.index_cast %c1_i32 : i32 to index
    %c0_10 = arith.constant 0 : index
    %c0_11 = arith.constant 0 : index
    %27 = vector.load %arg1[%26, %c0_10, %c0_11] : memref<8x8x128xbf16, #tpu.memory_space<vmem>>, vector<1x8x128xbf16>
    %28 = vector.shape_cast %27 : vector<1x8x128xbf16> to vector<8x128xbf16>
    %29 = arith.extf %28 : vector<8x128xbf16> to vector<8x128xf32>
    %cst_12 = arith.constant dense<0.000000e+00> : vector<8x128xf32>
    %30 = tpu.matmul %22, %0, %cst_12 {dimension_numbers = #tpu.dot_dimension_numbers<[1], [0], [0], [1], [0, 0, 1, 1], [], []>} : vector<8x32xbf16>, vector<32x128xbf16>, vector<8x128xf32> -> vector<8x128xf32>
    %31 = arith.addf %29, %30 : vector<8x128xf32>
    %c0_13 = arith.constant 0 : index
    %c0_14 = arith.constant 0 : index
    %32 = vector.load %arg11[%c0_13, %c0_14] : memref<8x32xf32, #tpu.memory_space<vmem>>, vector<8x32xf32>
    %33 = vector.extract_strided_slice %31 {offsets = [0, 0], sizes = [8, 96], strides = [1, 1]} : vector<8x128xf32> to vector<8x96xf32>
    %34 = arith.negf %33 : vector<8x96xf32>
    %35 = math.exp %34 : vector<8x96xf32>
    %cst_15 = arith.constant 1.000000e+00 : f32
    %36 = vector.broadcast %cst_15 : f32 to vector<8x96xf32>
    %37 = arith.addf %36, %35 : vector<8x96xf32>
    %38 = arith.divf %36, %37 : vector<8x96xf32>
    %39 = vector.extract_strided_slice %31 {offsets = [0, 96], sizes = [8, 32], strides = [1, 1]} : vector<8x128xf32> to vector<8x32xf32>
    %40 = math.tanh %39 : vector<8x32xf32>
    %41 = vector.extract_strided_slice %38 {offsets = [0, 32], sizes = [8, 32], strides = [1, 1]} : vector<8x96xf32> to vector<8x32xf32>
    %42 = arith.mulf %41, %32 : vector<8x32xf32>
    %43 = vector.extract_strided_slice %38 {offsets = [0, 0], sizes = [8, 32], strides = [1, 1]} : vector<8x96xf32> to vector<8x32xf32>
    %44 = arith.mulf %43, %40 : vector<8x32xf32>
    %45 = arith.addf %42, %44 : vector<8x32xf32>
    %46 = vector.extract_strided_slice %38 {offsets = [0, 64], sizes = [8, 32], strides = [1, 1]} : vector<8x96xf32> to vector<8x32xf32>
    %47 = math.tanh %45 : vector<8x32xf32>
    %48 = arith.mulf %46, %47 : vector<8x32xf32>
    %c0_16 = arith.constant 0 : index
    %c0_17 = arith.constant 0 : index
    %49 = vector.load %arg11[%c0_16, %c0_17] : memref<8x32xf32, #tpu.memory_space<vmem>>, vector<8x32xf32>
    tpu.vector_store %arg11[%c0_16, %c0_17], %45 {strides = array<i32>} : memref<8x32xf32, #tpu.memory_space<vmem>>, vector<8x32xf32>,
    %50 = arith.truncf %48 : vector<8x32xf32> to vector<8x32xbf16>
    %51 = arith.index_cast %c1_i32 : i32 to index
    %c0_18 = arith.constant 0 : index
    %c0_19 = arith.constant 0 : index
    %52 = vector.load %arg12[%51, %c0_18, %c0_19] : memref<8x8x32xbf16, #tpu.memory_space<vmem>>, vector<1x8x32xbf16>
    %53 = vector.shape_cast %52 : vector<1x8x32xbf16> to vector<8x32xbf16>
    %54 = vector.shape_cast %50 : vector<8x32xbf16> to vector<1x8x32xbf16>
    tpu.vector_store %arg12[%51, %c0_18, %c0_19], %54 {strides = array<i32>} : memref<8x8x32xbf16, #tpu.memory_space<vmem>>, vector<1x8x32xbf16>,
    %c2_i32 = arith.constant 2 : i32
    %55 = arith.index_cast %c2_i32 : i32 to index
    %c0_20 = arith.constant 0 : index
    %c0_21 = arith.constant 0 : index
    %56 = vector.load %arg1[%55, %c0_20, %c0_21] : memref<8x8x128xbf16, #tpu.memory_space<vmem>>, vector<1x8x128xbf16>
    %57 = vector.shape_cast %56 : vector<1x8x128xbf16> to vector<8x128xbf16>
    %58 = arith.extf %57 : vector<8x128xbf16> to vector<8x128xf32>
    %cst_22 = arith.constant dense<0.000000e+00> : vector<8x128xf32>
    %59 = tpu.matmul %50, %0, %cst_22 {dimension_numbers = #tpu.dot_dimension_numbers<[1], [0], [0], [1], [0, 0, 1, 1], [], []>} : vector<8x32xbf16>, vector<32x128xbf16>, vector<8x128xf32> -> vector<8x128xf32>
    %60 = arith.addf %58, %59 : vector<8x128xf32>
    %c0_23 = arith.constant 0 : index
    %c0_24 = arith.constant 0 : index
    %61 = vector.load %arg11[%c0_23, %c0_24] : memref<8x32xf32, #tpu.memory_space<vmem>>, vector<8x32xf32>
    %62 = vector.extract_strided_slice %60 {offsets = [0, 0], sizes = [8, 96], strides = [1, 1]} : vector<8x128xf32> to vector<8x96xf32>
    %63 = arith.negf %62 : vector<8x96xf32>
    %64 = math.exp %63 : vector<8x96xf32>
    %cst_25 = arith.constant 1.000000e+00 : f32
    %65 = vector.broadcast %cst_25 : f32 to vector<8x96xf32>
    %66 = arith.addf %65, %64 : vector<8x96xf32>
    %67 = arith.divf %65, %66 : vector<8x96xf32>
    %68 = vector.extract_strided_slice %60 {offsets = [0, 96], sizes = [8, 32], strides = [1, 1]} : vector<8x128xf32> to vector<8x32xf32>
    %69 = math.tanh %68 : vector<8x32xf32>
    %70 = vector.extract_strided_slice %67 {offsets = [0, 32], sizes = [8, 32], strides = [1, 1]} : vector<8x96xf32> to vector<8x32xf32>
    %71 = arith.mulf %70, %61 : vector<8x32xf32>
    %72 = vector.extract_strided_slice %67 {offsets = [0, 0], sizes = [8, 32], strides = [1, 1]} : vector<8x96xf32> to vector<8x32xf32>
    %73 = arith.mulf %72, %69 : vector<8x32xf32>
    %74 = arith.addf %71, %73 : vector<8x32xf32>
    %75 = vector.extract_strided_slice %67 {offsets = [0, 64], sizes = [8, 32], strides = [1, 1]} : vector<8x96xf32> to vector<8x32xf32>
    %76 = math.tanh %74 : vector<8x32xf32>
    %77 = arith.mulf %75, %76 : vector<8x32xf32>
    %c0_26 = arith.constant 0 : index
    %c0_27 = arith.constant 0 : index
    %78 = vector.load %arg11[%c0_26, %c0_27] : memref<8x32xf32, #tpu.memory_space<vmem>>, vector<8x32xf32>
    tpu.vector_store %arg11[%c0_26, %c0_27], %74 {strides = array<i32>} : memref<8x32xf32, #tpu.memory_space<vmem>>, vector<8x32xf32>,
    %79 = arith.truncf %77 : vector<8x32xf32> to vector<8x32xbf16>
    %80 = arith.index_cast %c2_i32 : i32 to index
    %c0_28 = arith.constant 0 : index
    %c0_29 = arith.constant 0 : index
    %81 = vector.load %arg12[%80, %c0_28, %c0_29] : memref<8x8x32xbf16, #tpu.memory_space<vmem>>, vector<1x8x32xbf16>
    %82 = vector.shape_cast %81 : vector<1x8x32xbf16> to vector<8x32xbf16>
    %83 = vector.shape_cast %79 : vector<8x32xbf16> to vector<1x8x32xbf16>
    tpu.vector_store %arg12[%80, %c0_28, %c0_29], %83 {strides = array<i32>} : memref<8x8x32xbf16, #tpu.memory_space<vmem>>, vector<1x8x32xbf16>,
    %c3_i32 = arith.constant 3 : i32
    %84 = arith.index_cast %c3_i32 : i32 to index
    %c0_30 = arith.constant 0 : index
    %c0_31 = arith.constant 0 : index
    %85 = vector.load %arg1[%84, %c0_30, %c0_31] : memref<8x8x128xbf16, #tpu.memory_space<vmem>>, vector<1x8x128xbf16>
    %86 = vector.shape_cast %85 : vector<1x8x128xbf16> to vector<8x128xbf16>
    %87 = arith.extf %86 : vector<8x128xbf16> to vector<8x128xf32>
    %cst_32 = arith.constant dense<0.000000e+00> : vector<8x128xf32>
    %88 = tpu.matmul %79, %0, %cst_32 {dimension_numbers = #tpu.dot_dimension_numbers<[1], [0], [0], [1], [0, 0, 1, 1], [], []>} : vector<8x32xbf16>, vector<32x128xbf16>, vector<8x128xf32> -> vector<8x128xf32>
    %89 = arith.addf %87, %88 : vector<8x128xf32>
    %c0_33 = arith.constant 0 : index
    %c0_34 = arith.constant 0 : index
    %90 = vector.load %arg11[%c0_33, %c0_34] : memref<8x32xf32, #tpu.memory_space<vmem>>, vector<8x32xf32>
    %91 = vector.extract_strided_slice %89 {offsets = [0, 0], sizes = [8, 96], strides = [1, 1]} : vector<8x128xf32> to vector<8x96xf32>
    %92 = arith.negf %91 : vector<8x96xf32>
    %93 = math.exp %92 : vector<8x96xf32>
    %cst_35 = arith.constant 1.000000e+00 : f32
    %94 = vector.broadcast %cst_35 : f32 to vector<8x96xf32>
    %95 = arith.addf %94, %93 : vector<8x96xf32>
    %96 = arith.divf %94, %95 : vector<8x96xf32>
    %97 = vector.extract_strided_slice %89 {offsets = [0, 96], sizes = [8, 32], strides = [1, 1]} : vector<8x128xf32> to vector<8x32xf32>
    %98 = math.tanh %97 : vector<8x32xf32>
    %99 = vector.extract_strided_slice %96 {offsets = [0, 32], sizes = [8, 32], strides = [1, 1]} : vector<8x96xf32> to vector<8x32xf32>
    %100 = arith.mulf %99, %90 : vector<8x32xf32>
    %101 = vector.extract_strided_slice %96 {offsets = [0, 0], sizes = [8, 32], strides = [1, 1]} : vector<8x96xf32> to vector<8x32xf32>
    %102 = arith.mulf %101, %98 : vector<8x32xf32>
    %103 = arith.addf %100, %102 : vector<8x32xf32>
    %104 = vector.extract_strided_slice %96 {offsets = [0, 64], sizes = [8, 32], strides = [1, 1]} : vector<8x96xf32> to vector<8x32xf32>
    %105 = math.tanh %103 : vector<8x32xf32>
    %106 = arith.mulf %104, %105 : vector<8x32xf32>
    %c0_36 = arith.constant 0 : index
    %c0_37 = arith.constant 0 : index
    %107 = vector.load %arg11[%c0_36, %c0_37] : memref<8x32xf32, #tpu.memory_space<vmem>>, vector<8x32xf32>
    tpu.vector_store %arg11[%c0_36, %c0_37], %103 {strides = array<i32>} : memref<8x32xf32, #tpu.memory_space<vmem>>, vector<8x32xf32>,
    %108 = arith.truncf %106 : vector<8x32xf32> to vector<8x32xbf16>
    %109 = arith.index_cast %c3_i32 : i32 to index
    %c0_38 = arith.constant 0 : index
    %c0_39 = arith.constant 0 : index
    %110 = vector.load %arg12[%109, %c0_38, %c0_39] : memref<8x8x32xbf16, #tpu.memory_space<vmem>>, vector<1x8x32xbf16>
    %111 = vector.shape_cast %110 : vector<1x8x32xbf16> to vector<8x32xbf16>
    %112 = vector.shape_cast %108 : vector<8x32xbf16> to vector<1x8x32xbf16>
    tpu.vector_store %arg12[%109, %c0_38, %c0_39], %112 {strides = array<i32>} : memref<8x8x32xbf16, #tpu.memory_space<vmem>>, vector<1x8x32xbf16>,
    %c4_i32 = arith.constant 4 : i32
    %113 = arith.index_cast %c4_i32 : i32 to index
    %c0_40 = arith.constant 0 : index
    %c0_41 = arith.constant 0 : index
    %114 = vector.load %arg1[%113, %c0_40, %c0_41] : memref<8x8x128xbf16, #tpu.memory_space<vmem>>, vector<1x8x128xbf16>
    %115 = vector.shape_cast %114 : vector<1x8x128xbf16> to vector<8x128xbf16>
    %116 = arith.extf %115 : vector<8x128xbf16> to vector<8x128xf32>
    %cst_42 = arith.constant dense<0.000000e+00> : vector<8x128xf32>
    %117 = tpu.matmul %108, %0, %cst_42 {dimension_numbers = #tpu.dot_dimension_numbers<[1], [0], [0], [1], [0, 0, 1, 1], [], []>} : vector<8x32xbf16>, vector<32x128xbf16>, vector<8x128xf32> -> vector<8x128xf32>
    %118 = arith.addf %116, %117 : vector<8x128xf32>
    %c0_43 = arith.constant 0 : index
    %c0_44 = arith.constant 0 : index
    %119 = vector.load %arg11[%c0_43, %c0_44] : memref<8x32xf32, #tpu.memory_space<vmem>>, vector<8x32xf32>
    %120 = vector.extract_strided_slice %118 {offsets = [0, 0], sizes = [8, 96], strides = [1, 1]} : vector<8x128xf32> to vector<8x96xf32>
    %121 = arith.negf %120 : vector<8x96xf32>
    %122 = math.exp %121 : vector<8x96xf32>
    %cst_45 = arith.constant 1.000000e+00 : f32
    %123 = vector.broadcast %cst_45 : f32 to vector<8x96xf32>
    %124 = arith.addf %123, %122 : vector<8x96xf32>
    %125 = arith.divf %123, %124 : vector<8x96xf32>
    %126 = vector.extract_strided_slice %118 {offsets = [0, 96], sizes = [8, 32], strides = [1, 1]} : vector<8x128xf32> to vector<8x32xf32>
    %127 = math.tanh %126 : vector<8x32xf32>
    %128 = vector.extract_strided_slice %125 {offsets = [0, 32], sizes = [8, 32], strides = [1, 1]} : vector<8x96xf32> to vector<8x32xf32>
    %129 = arith.mulf %128, %119 : vector<8x32xf32>
    %130 = vector.extract_strided_slice %125 {offsets = [0, 0], sizes = [8, 32], strides = [1, 1]} : vector<8x96xf32> to vector<8x32xf32>
    %131 = arith.mulf %130, %127 : vector<8x32xf32>
    %132 = arith.addf %129, %131 : vector<8x32xf32>
    %133 = vector.extract_strided_slice %125 {offsets = [0, 64], sizes = [8, 32], strides = [1, 1]} : vector<8x96xf32> to vector<8x32xf32>
    %134 = math.tanh %132 : vector<8x32xf32>
    %135 = arith.mulf %133, %134 : vector<8x32xf32>
    %c0_46 = arith.constant 0 : index
    %c0_47 = arith.constant 0 : index
    %136 = vector.load %arg11[%c0_46, %c0_47] : memref<8x32xf32, #tpu.memory_space<vmem>>, vector<8x32xf32>
    tpu.vector_store %arg11[%c0_46, %c0_47], %132 {strides = array<i32>} : memref<8x32xf32, #tpu.memory_space<vmem>>, vector<8x32xf32>,
    %137 = arith.truncf %135 : vector<8x32xf32> to vector<8x32xbf16>
    %138 = arith.index_cast %c4_i32 : i32 to index
    %c0_48 = arith.constant 0 : index
    %c0_49 = arith.constant 0 : index
    %139 = vector.load %arg12[%138, %c0_48, %c0_49] : memref<8x8x32xbf16, #tpu.memory_space<vmem>>, vector<1x8x32xbf16>
    %140 = vector.shape_cast %139 : vector<1x8x32xbf16> to vector<8x32xbf16>
    %141 = vector.shape_cast %137 : vector<8x32xbf16> to vector<1x8x32xbf16>
    tpu.vector_store %arg12[%138, %c0_48, %c0_49], %141 {strides = array<i32>} : memref<8x8x32xbf16, #tpu.memory_space<vmem>>, vector<1x8x32xbf16>,
    %c5_i32 = arith.constant 5 : i32
    %142 = arith.index_cast %c5_i32 : i32 to index
    %c0_50 = arith.constant 0 : index
    %c0_51 = arith.constant 0 : index
    %143 = vector.load %arg1[%142, %c0_50, %c0_51] : memref<8x8x128xbf16, #tpu.memory_space<vmem>>, vector<1x8x128xbf16>
    %144 = vector.shape_cast %143 : vector<1x8x128xbf16> to vector<8x128xbf16>
    %145 = arith.extf %144 : vector<8x128xbf16> to vector<8x128xf32>
    %cst_52 = arith.constant dense<0.000000e+00> : vector<8x128xf32>
    %146 = tpu.matmul %137, %0, %cst_52 {dimension_numbers = #tpu.dot_dimension_numbers<[1], [0], [0], [1], [0, 0, 1, 1], [], []>} : vector<8x32xbf16>, vector<32x128xbf16>, vector<8x128xf32> -> vector<8x128xf32>
    %147 = arith.addf %145, %146 : vector<8x128xf32>
    %c0_53 = arith.constant 0 : index
    %c0_54 = arith.constant 0 : index
    %148 = vector.load %arg11[%c0_53, %c0_54] : memref<8x32xf32, #tpu.memory_space<vmem>>, vector<8x32xf32>
    %149 = vector.extract_strided_slice %147 {offsets = [0, 0], sizes = [8, 96], strides = [1, 1]} : vector<8x128xf32> to vector<8x96xf32>
    %150 = arith.negf %149 : vector<8x96xf32>
    %151 = math.exp %150 : vector<8x96xf32>
    %cst_55 = arith.constant 1.000000e+00 : f32
    %152 = vector.broadcast %cst_55 : f32 to vector<8x96xf32>
    %153 = arith.addf %152, %151 : vector<8x96xf32>
    %154 = arith.divf %152, %153 : vector<8x96xf32>
    %155 = vector.extract_strided_slice %147 {offsets = [0, 96], sizes = [8, 32], strides = [1, 1]} : vector<8x128xf32> to vector<8x32xf32>
    %156 = math.tanh %155 : vector<8x32xf32>
    %157 = vector.extract_strided_slice %154 {offsets = [0, 32], sizes = [8, 32], strides = [1, 1]} : vector<8x96xf32> to vector<8x32xf32>
    %158 = arith.mulf %157, %148 : vector<8x32xf32>
    %159 = vector.extract_strided_slice %154 {offsets = [0, 0], sizes = [8, 32], strides = [1, 1]} : vector<8x96xf32> to vector<8x32xf32>
    %160 = arith.mulf %159, %156 : vector<8x32xf32>
    %161 = arith.addf %158, %160 : vector<8x32xf32>
    %162 = vector.extract_strided_slice %154 {offsets = [0, 64], sizes = [8, 32], strides = [1, 1]} : vector<8x96xf32> to vector<8x32xf32>
    %163 = math.tanh %161 : vector<8x32xf32>
    %164 = arith.mulf %162, %163 : vector<8x32xf32>
    %c0_56 = arith.constant 0 : index
    %c0_57 = arith.constant 0 : index
    %165 = vector.load %arg11[%c0_56, %c0_57] : memref<8x32xf32, #tpu.memory_space<vmem>>, vector<8x32xf32>
    tpu.vector_store %arg11[%c0_56, %c0_57], %161 {strides = array<i32>} : memref<8x32xf32, #tpu.memory_space<vmem>>, vector<8x32xf32>,
    %166 = arith.truncf %164 : vector<8x32xf32> to vector<8x32xbf16>
    %167 = arith.index_cast %c5_i32 : i32 to index
    %c0_58 = arith.constant 0 : index
    %c0_59 = arith.constant 0 : index
    %168 = vector.load %arg12[%167, %c0_58, %c0_59] : memref<8x8x32xbf16, #tpu.memory_space<vmem>>, vector<1x8x32xbf16>
    %169 = vector.shape_cast %168 : vector<1x8x32xbf16> to vector<8x32xbf16>
    %170 = vector.shape_cast %166 : vector<8x32xbf16> to vector<1x8x32xbf16>
    tpu.vector_store %arg12[%167, %c0_58, %c0_59], %170 {strides = array<i32>} : memref<8x8x32xbf16, #tpu.memory_space<vmem>>, vector<1x8x32xbf16>,
    %c6_i32 = arith.constant 6 : i32
    %171 = arith.index_cast %c6_i32 : i32 to index
    %c0_60 = arith.constant 0 : index
    %c0_61 = arith.constant 0 : index
    %172 = vector.load %arg1[%171, %c0_60, %c0_61] : memref<8x8x128xbf16, #tpu.memory_space<vmem>>, vector<1x8x128xbf16>
    %173 = vector.shape_cast %172 : vector<1x8x128xbf16> to vector<8x128xbf16>
    %174 = arith.extf %173 : vector<8x128xbf16> to vector<8x128xf32>
    %cst_62 = arith.constant dense<0.000000e+00> : vector<8x128xf32>
    %175 = tpu.matmul %166, %0, %cst_62 {dimension_numbers = #tpu.dot_dimension_numbers<[1], [0], [0], [1], [0, 0, 1, 1], [], []>} : vector<8x32xbf16>, vector<32x128xbf16>, vector<8x128xf32> -> vector<8x128xf32>
    %176 = arith.addf %174, %175 : vector<8x128xf32>
    %c0_63 = arith.constant 0 : index
    %c0_64 = arith.constant 0 : index
    %177 = vector.load %arg11[%c0_63, %c0_64] : memref<8x32xf32, #tpu.memory_space<vmem>>, vector<8x32xf32>
    %178 = vector.extract_strided_slice %176 {offsets = [0, 0], sizes = [8, 96], strides = [1, 1]} : vector<8x128xf32> to vector<8x96xf32>
    %179 = arith.negf %178 : vector<8x96xf32>
    %180 = math.exp %179 : vector<8x96xf32>
    %cst_65 = arith.constant 1.000000e+00 : f32
    %181 = vector.broadcast %cst_65 : f32 to vector<8x96xf32>
    %182 = arith.addf %181, %180 : vector<8x96xf32>
    %183 = arith.divf %181, %182 : vector<8x96xf32>
    %184 = vector.extract_strided_slice %176 {offsets = [0, 96], sizes = [8, 32], strides = [1, 1]} : vector<8x128xf32> to vector<8x32xf32>
    %185 = math.tanh %184 : vector<8x32xf32>
    %186 = vector.extract_strided_slice %183 {offsets = [0, 32], sizes = [8, 32], strides = [1, 1]} : vector<8x96xf32> to vector<8x32xf32>
    %187 = arith.mulf %186, %177 : vector<8x32xf32>
    %188 = vector.extract_strided_slice %183 {offsets = [0, 0], sizes = [8, 32], strides = [1, 1]} : vector<8x96xf32> to vector<8x32xf32>
    %189 = arith.mulf %188, %185 : vector<8x32xf32>
    %190 = arith.addf %187, %189 : vector<8x32xf32>
    %191 = vector.extract_strided_slice %183 {offsets = [0, 64], sizes = [8, 32], strides = [1, 1]} : vector<8x96xf32> to vector<8x32xf32>
    %192 = math.tanh %190 : vector<8x32xf32>
    %193 = arith.mulf %191, %192 : vector<8x32xf32>
    %c0_66 = arith.constant 0 : index
    %c0_67 = arith.constant 0 : index
    %194 = vector.load %arg11[%c0_66, %c0_67] : memref<8x32xf32, #tpu.memory_space<vmem>>, vector<8x32xf32>
    tpu.vector_store %arg11[%c0_66, %c0_67], %190 {strides = array<i32>} : memref<8x32xf32, #tpu.memory_space<vmem>>, vector<8x32xf32>,
    %195 = arith.truncf %193 : vector<8x32xf32> to vector<8x32xbf16>
    %196 = arith.index_cast %c6_i32 : i32 to index
    %c0_68 = arith.constant 0 : index
    %c0_69 = arith.constant 0 : index
    %197 = vector.load %arg12[%196, %c0_68, %c0_69] : memref<8x8x32xbf16, #tpu.memory_space<vmem>>, vector<1x8x32xbf16>
    %198 = vector.shape_cast %197 : vector<1x8x32xbf16> to vector<8x32xbf16>
    %199 = vector.shape_cast %195 : vector<8x32xbf16> to vector<1x8x32xbf16>
    tpu.vector_store %arg12[%196, %c0_68, %c0_69], %199 {strides = array<i32>} : memref<8x8x32xbf16, #tpu.memory_space<vmem>>, vector<1x8x32xbf16>,
    %c7_i32 = arith.constant 7 : i32
    %200 = arith.index_cast %c7_i32 : i32 to index
    %c0_70 = arith.constant 0 : index
    %c0_71 = arith.constant 0 : index
    %201 = vector.load %arg1[%200, %c0_70, %c0_71] : memref<8x8x128xbf16, #tpu.memory_space<vmem>>, vector<1x8x128xbf16>
    %202 = vector.shape_cast %201 : vector<1x8x128xbf16> to vector<8x128xbf16>
    %203 = arith.extf %202 : vector<8x128xbf16> to vector<8x128xf32>
    %cst_72 = arith.constant dense<0.000000e+00> : vector<8x128xf32>
    %204 = tpu.matmul %195, %0, %cst_72 {dimension_numbers = #tpu.dot_dimension_numbers<[1], [0], [0], [1], [0, 0, 1, 1], [], []>} : vector<8x32xbf16>, vector<32x128xbf16>, vector<8x128xf32> -> vector<8x128xf32>
    %205 = arith.addf %203, %204 : vector<8x128xf32>
    %c0_73 = arith.constant 0 : index
    %c0_74 = arith.constant 0 : index
    %206 = vector.load %arg11[%c0_73, %c0_74] : memref<8x32xf32, #tpu.memory_space<vmem>>, vector<8x32xf32>
    %207 = vector.extract_strided_slice %205 {offsets = [0, 0], sizes = [8, 96], strides = [1, 1]} : vector<8x128xf32> to vector<8x96xf32>
    %208 = arith.negf %207 : vector<8x96xf32>
    %209 = math.exp %208 : vector<8x96xf32>
    %cst_75 = arith.constant 1.000000e+00 : f32
    %210 = vector.broadcast %cst_75 : f32 to vector<8x96xf32>
    %211 = arith.addf %210, %209 : vector<8x96xf32>
    %212 = arith.divf %210, %211 : vector<8x96xf32>
    %213 = vector.extract_strided_slice %205 {offsets = [0, 96], sizes = [8, 32], strides = [1, 1]} : vector<8x128xf32> to vector<8x32xf32>
    %214 = math.tanh %213 : vector<8x32xf32>
    %215 = vector.extract_strided_slice %212 {offsets = [0, 32], sizes = [8, 32], strides = [1, 1]} : vector<8x96xf32> to vector<8x32xf32>
    %216 = arith.mulf %215, %206 : vector<8x32xf32>
    %217 = vector.extract_strided_slice %212 {offsets = [0, 0], sizes = [8, 32], strides = [1, 1]} : vector<8x96xf32> to vector<8x32xf32>
    %218 = arith.mulf %217, %214 : vector<8x32xf32>
    %219 = arith.addf %216, %218 : vector<8x32xf32>
    %220 = vector.extract_strided_slice %212 {offsets = [0, 64], sizes = [8, 32], strides = [1, 1]} : vector<8x96xf32> to vector<8x32xf32>
    %221 = math.tanh %219 : vector<8x32xf32>
    %222 = arith.mulf %220, %221 : vector<8x32xf32>
    %c0_76 = arith.constant 0 : index
    %c0_77 = arith.constant 0 : index
    %223 = vector.load %arg11[%c0_76, %c0_77] : memref<8x32xf32, #tpu.memory_space<vmem>>, vector<8x32xf32>
    tpu.vector_store %arg11[%c0_76, %c0_77], %219 {strides = array<i32>} : memref<8x32xf32, #tpu.memory_space<vmem>>, vector<8x32xf32>,
    %224 = arith.truncf %222 : vector<8x32xf32> to vector<8x32xbf16>
    %225 = arith.index_cast %c7_i32 : i32 to index
    %c0_78 = arith.constant 0 : index
    %c0_79 = arith.constant 0 : index
    %226 = vector.load %arg12[%225, %c0_78, %c0_79] : memref<8x8x32xbf16, #tpu.memory_space<vmem>>, vector<1x8x32xbf16>
    %227 = vector.shape_cast %226 : vector<1x8x32xbf16> to vector<8x32xbf16>
    %228 = vector.shape_cast %224 : vector<8x32xbf16> to vector<1x8x32xbf16>
    tpu.vector_store %arg12[%225, %c0_78, %c0_79], %228 {strides = array<i32>} : memref<8x8x32xbf16, #tpu.memory_space<vmem>>, vector<1x8x32xbf16>,
    %c7_i32_80 = arith.constant 7 : i32
    %c0_81 = arith.constant 0 : index
    %c0_82 = arith.constant 0 : index
    %c0_83 = arith.constant 0 : index
    %229 = vector.load %arg12[%c0_81, %c0_82, %c0_83] : memref<8x8x32xbf16, #tpu.memory_space<vmem>>, vector<8x8x32xbf16>
    %230 = vector.shape_cast %229 : vector<8x8x32xbf16> to vector<64x32xbf16>
    %c0_84 = arith.constant 0 : index
    %c0_85 = arith.constant 0 : index
    %231 = vector.load %arg4[%c0_84, %c0_85] : memref<32x1xbf16, #tpu.memory_space<vmem>>, vector<32x1xbf16>
    %cst_86 = arith.constant dense<0.000000e+00> : vector<8x1xf32>
    %232 = tpu.matmul %224, %231, %cst_86 {dimension_numbers = #tpu.dot_dimension_numbers<[1], [0], [0], [1], [0, 0, 1, 1], [], []>} : vector<8x32xbf16>, vector<32x1xbf16>, vector<8x1xf32> -> vector<8x1xf32>
    %c0_87 = arith.constant 0 : index
    %c0_88 = arith.constant 0 : index
    %233 = vector.load %arg5[%c0_87, %c0_88] : memref<1x1xf32, #tpu.memory_space<vmem>>, vector<1x1xf32>
    %234 = vector.broadcast %233 : vector<1x1xf32> to vector<8x1xf32>
    %235 = arith.addf %232, %234 : vector<8x1xf32>
    %c0_89 = arith.constant 0 : index
    %c0_90 = arith.constant 0 : index
    %236 = vector.load %arg3[%c0_89, %c0_90] : memref<32x1xbf16, #tpu.memory_space<vmem>>, vector<32x1xbf16>
    %cst_91 = arith.constant dense<0.000000e+00> : vector<64x1xf32>
    %237 = tpu.matmul %230, %236, %cst_91 {dimension_numbers = #tpu.dot_dimension_numbers<[1], [0], [0], [1], [0, 0, 1, 1], [], []>} : vector<64x32xbf16>, vector<32x1xbf16>, vector<64x1xf32> -> vector<64x1xf32>
    %238 = vector.shape_cast %237 : vector<64x1xf32> to vector<8x8x1xf32>
    %239 = vector.shape_cast %235 : vector<8x1xf32> to vector<1x8x1xf32>
    %240 = vector.broadcast %239 : vector<1x8x1xf32> to vector<8x8x1xf32>
    %241 = arith.addf %238, %240 : vector<8x8x1xf32>
    %cst_92 = arith.constant dense<0xFF800000> : vector<8x1xf32>
    %242 = vector.multi_reduction <maximumf>, %241, %cst_92 [0] : vector<8x8x1xf32> to vector<8x1xf32>
    %243 = vector.shape_cast %242 : vector<8x1xf32> to vector<1x8x1xf32>
    %244 = vector.broadcast %243 : vector<1x8x1xf32> to vector<8x8x1xf32>
    %245 = arith.subf %241, %244 : vector<8x8x1xf32>
    %246 = math.exp %245 : vector<8x8x1xf32>
    %cst_93 = arith.constant dense<0.000000e+00> : vector<8x1xf32>
    %247 = vector.multi_reduction <add>, %246, %cst_93 [0] : vector<8x8x1xf32> to vector<8x1xf32>
    %248 = vector.shape_cast %247 : vector<8x1xf32> to vector<1x8x1xf32>
    %249 = tpu.reciprocal %248 {approx = true} : vector<1x8x1xf32> -> vector<1x8x1xf32>
    %250 = vector.broadcast %249 : vector<1x8x1xf32> to vector<8x8x1xf32>
    %251 = arith.mulf %246, %250 : vector<8x8x1xf32>
    %252 = arith.extf %229 : vector<8x8x32xbf16> to vector<8x8x32xf32>
    %253 = vector.broadcast %251 : vector<8x8x1xf32> to vector<8x8x32xf32>
    %254 = arith.mulf %253, %252 : vector<8x8x32xf32>
    %cst_94 = arith.constant dense<0.000000e+00> : vector<8x32xf32>
    %255 = vector.multi_reduction <add>, %254, %cst_94 [0] : vector<8x8x32xf32> to vector<8x32xf32>
    %256 = arith.truncf %255 : vector<8x32xf32> to vector<8x32xbf16>
    %c0_95 = arith.constant 0 : index
    %c0_96 = arith.constant 0 : index
    %257 = vector.load %arg6[%c0_95, %c0_96] : memref<32x200xbf16, #tpu.memory_space<vmem>>, vector<32x200xbf16>
    %cst_97 = arith.constant dense<0.000000e+00> : vector<8x200xf32>
    %258 = tpu.matmul %256, %257, %cst_97 {dimension_numbers = #tpu.dot_dimension_numbers<[1], [0], [0], [1], [0, 0, 1, 1], [], []>} : vector<8x32xbf16>, vector<32x200xbf16>, vector<8x200xf32> -> vector<8x200xf32>
    %c0_98 = arith.constant 0 : index
    %c0_99 = arith.constant 0 : index
    %259 = vector.load %arg7[%c0_98, %c0_99] : memref<1x200xf32, #tpu.memory_space<vmem>>, vector<1x200xf32>
    %260 = vector.broadcast %259 : vector<1x200xf32> to vector<8x200xf32>
    %261 = arith.addf %258, %260 : vector<8x200xf32>
    %262 = arith.truncf %261 : vector<8x200xf32> to vector<8x200xbf16>
    %c0_100 = arith.constant 0 : index
    %c0_101 = arith.constant 0 : index
    %263 = vector.load %arg8[%c0_100, %c0_101] : memref<200x8xbf16, #tpu.memory_space<vmem>>, vector<200x8xbf16>
    %cst_102 = arith.constant dense<0.000000e+00> : vector<8x8xf32>
    %264 = tpu.matmul %262, %263, %cst_102 {dimension_numbers = #tpu.dot_dimension_numbers<[1], [0], [0], [1], [0, 0, 1, 1], [], []>} : vector<8x200xbf16>, vector<200x8xbf16>, vector<8x8xf32> -> vector<8x8xf32>
    %c0_103 = arith.constant 0 : index
    %c0_104 = arith.constant 0 : index
    %265 = vector.load %arg9[%c0_103, %c0_104] : memref<1x8xf32, #tpu.memory_space<vmem>>, vector<1x8xf32>
    %266 = vector.broadcast %265 : vector<1x8xf32> to vector<8x8xf32>
    %267 = arith.addf %264, %266 : vector<8x8xf32>
    %268 = arith.negf %267 : vector<8x8xf32>
    %269 = math.exp %268 : vector<8x8xf32>
    %cst_105 = arith.constant 1.000000e+00 : f32
    %270 = vector.broadcast %cst_105 : f32 to vector<8x8xf32>
    %271 = arith.addf %270, %269 : vector<8x8xf32>
    %272 = arith.divf %270, %271 : vector<8x8xf32>
    %c0_106 = arith.constant 0 : index
    %c0_107 = arith.constant 0 : index
    %273 = vector.load %arg10[%c0_106, %c0_107] : memref<8x8xf32, #tpu.memory_space<vmem>>, vector<8x8xf32>
    tpu.vector_store %arg10[%c0_106, %c0_107], %272 {strides = array<i32>} : memref<8x8xf32, #tpu.memory_space<vmem>>, vector<8x8xf32>,
    return
  }
  func.func @transform_0(%arg0: i32) -> (i32, i32, i32) {
    %c0_i32 = arith.constant 0 : i32
    %c0_i32_0 = arith.constant 0 : i32
    %c0_i32_1 = arith.constant 0 : i32
    return %c0_i32, %arg0, %c0_i32_0 : i32, i32, i32
  }
  func.func @transform_1(%arg0: i32) -> (i32, i32) {
    %c0_i32 = arith.constant 0 : i32
    %c0_i32_0 = arith.constant 0 : i32
    %c0_i32_1 = arith.constant 0 : i32
    return %c0_i32, %c0_i32_0 : i32, i32
  }
  func.func @transform_2(%arg0: i32) -> (i32, i32) {
    %c0_i32 = arith.constant 0 : i32
    %c0_i32_0 = arith.constant 0 : i32
    %c0_i32_1 = arith.constant 0 : i32
    return %c0_i32, %c0_i32_0 : i32, i32
  }
  func.func @transform_3(%arg0: i32) -> (i32, i32) {
    %c0_i32 = arith.constant 0 : i32
    %c0_i32_0 = arith.constant 0 : i32
    %c0_i32_1 = arith.constant 0 : i32
    return %c0_i32, %c0_i32_0 : i32, i32
  }
  func.func @transform_4(%arg0: i32) -> (i32, i32) {
    %c0_i32 = arith.constant 0 : i32
    %c0_i32_0 = arith.constant 0 : i32
    %c0_i32_1 = arith.constant 0 : i32
    return %c0_i32, %c0_i32_0 : i32, i32
  }
  func.func @transform_5(%arg0: i32) -> (i32, i32) {
    %c0_i32 = arith.constant 0 : i32
    %c0_i32_0 = arith.constant 0 : i32
    %c0_i32_1 = arith.constant 0 : i32
    return %c0_i32, %c0_i32_0 : i32, i32
  }
  func.func @transform_6(%arg0: i32) -> (i32, i32) {
    %c0_i32 = arith.constant 0 : i32
    %c0_i32_0 = arith.constant 0 : i32
    %c0_i32_1 = arith.constant 0 : i32
    return %c0_i32, %c0_i32_0 : i32, i32
  }
  func.func @transform_7(%arg0: i32) -> (i32, i32) {
    %c0_i32 = arith.constant 0 : i32
    %c0_i32_0 = arith.constant 0 : i32
    %c0_i32_1 = arith.constant 0 : i32
    return %c0_i32, %c0_i32_0 : i32, i32
  }
  func.func @transform_8(%arg0: i32) -> (i32, i32) {
    %c0_i32 = arith.constant 0 : i32
    %c0_i32_0 = arith.constant 0 : i32
    %c0_i32_1 = arith.constant 0 : i32
    return %c0_i32, %c0_i32_0 : i32, i32
  }
  func.func @transform_9(%arg0: i32) -> (i32, i32) {
    %c0_i32 = arith.constant 0 : i32
    %c0_i32_0 = arith.constant 0 : i32
    return %arg0, %c0_i32 : i32, i32
  }
}

</mosaic_0001>

<llo_original>
// kernel: tpu_custom_call.1
$region0: #{tpu_custom_call.1}
  #allocation0 [shape = 'u32[]', space=smem, size = 0x4, offset = 0x4, fixed_abs, tag = 'smem constant byte address 0x4 - core index']
  #allocation1 [shape = 'u32[144,128]{1,0:T(1,128)}', space=vmem, size = 0x12000, scoped, tag = 'internal scratch']
  #allocation2 [shape = 'f32[8,32]{1,0:T(8,128)}', space=vmem, size = 0x1000, scoped, tag = 'scratch operand']
  #allocation3 [shape = 'bf16[8,8,32]{2,1,0:T(8,128)(2,1)}', space=vmem, size = 0x4000, scoped, tag = 'scratch operand']
  #allocation4 [shape = 'f32[1,1]{1,0:T(1,128)S(1)}', space=vmem, size = 0x200, scoped, tag = 'scoped memory for tpu_custom_call.1']
  %s0 = inlined_call_operand.vmem [shape: bf16[8,16,128], index: 0, kind: input, shape index: {}]
  %s1 = inlined_call_operand.vmem [shape: bf16[32,128], index: 1, kind: input, shape index: {}]
  %s2 = inlined_call_operand.vmem [shape: bf16[32,1], index: 2, kind: input, shape index: {}]
  %s3 = inlined_call_operand.vmem [shape: bf16[32,1], index: 3, kind: input, shape index: {}]
  %s4 = inlined_call_operand.<no memory space> [shape: f32[1,1], index: 4, kind: input, shape index: {}]
  %s5 = inlined_call_operand.vmem [shape: bf16[32,200], index: 5, kind: input, shape index: {}]
  %s6 = inlined_call_operand.vmem [shape: f32[1,200], index: 6, kind: input, shape index: {}]
  %s7 = inlined_call_operand.vmem [shape: bf16[200,8], index: 7, kind: input, shape index: {}]
  %s8 = inlined_call_operand.vmem [shape: f32[1,8], index: 8, kind: input, shape index: {}]
  %s9 = inlined_call_operand.vmem [shape: f32[16,8], index: 9, kind: output, shape index: {}]
  %s10 = sld [smem:[#allocation0]]
  $region110: #{tpu_custom_call.1} parent=0
    _
  %s12 = ssub.s32 1, %s10
  %s13 = scalar_select 0, %s12, %s10
  %v14 = vstv %s4
  %15 = vst [vmem:[#allocation4] sm:$0x1] %v14
  $region1: #{tpu_custom_call.1} parent=0
    #allocation5 [shape = 'u8[32768]{0}', space=vmem, size = 0x8000, scoped, tag = 'input window, operand 0']
    loop: start=0, step=1, limit=4
    $region2: #{tpu_custom_call.1} parent=1 // loop_pre_header
      _
    $region3: #{tpu_custom_call.1} parent=1 // loop_header
      %s17 = sphi 0, %s21
      %p18 = scmp.ge.s32.totalorder %s17, 4
      %s27 = sphi 0, %s29
      %s30 = sphi 0, %s27
      %s31 = sphi 0, %s30
      %s47 = sphi 0, %s31
      %s51 = sphi 0, %s51
      %s53 = sphi 0, %s51
      %s54 = sphi 0, %s53
      %s68 = sphi 0, %s54
      %s72 = sphi 0, %s72
      %s74 = sphi 0, %s72
      %s75 = sphi 0, %s74
      %s89 = sphi 0, %s75
      %s93 = sphi 0, %s93
      %s95 = sphi 0, %s93
      %s96 = sphi 0, %s95
      %s110 = sphi 0, %s96
      %s114 = sphi 0, %s114
      %s116 = sphi 0, %s114
      %s117 = sphi 0, %s116
      %s131 = sphi 0, %s117
      %s135 = sphi 0, %s135
      %s137 = sphi 0, %s135
      %s138 = sphi 0, %s137
      %s152 = sphi 0, %s138
      %s156 = sphi 0, %s156
      %s158 = sphi 0, %s156
      %s159 = sphi 0, %s158
      %s173 = sphi 0, %s159
      %s177 = sphi 0, %s177
      %s179 = sphi 0, %s177
      %s180 = sphi 0, %s179
      %s194 = sphi 0, %s180
      %s198 = sphi 0, %s198
      %s200 = sphi 0, %s198
      %s201 = sphi 0, %s200
      %s215 = sphi 0, %s201
      %s221 = sphi 0, %s223
      %s224 = sphi 0, %s221
      %s225 = sphi 0, %s224
      %s241 = sphi 0, %s225
    $region4: #{tpu_custom_call.1} parent=1 // loop_header_branch
      %20 = sbr.rel (%p18) target = $region8
    $region5: #{tpu_custom_call.1} parent=1 // loop_body
      %s22 = ssub.s32 %s17, 1
      %s23 = ssub.s32 %s17, 2
      %s24 = sadd.s32 %s17, 1
      %s25 = ssub.s32 %s17, %s24
      %p26 = scmp.eq.s32.totalorder %s25, 0
      %s28 = sadd.s32 %s27, 1
      %s29 = scalar_select %p26, %s27, %s28
      %p32 = pneg %p26
      %p33 = scmp.eq.s32.totalorder %s17, 1
      %p34 = por %p32, %p33
      %p35 = scmp.ne.s32.totalorder %s27, %s30
      %p36 = scmp.eq.s32.totalorder %s17, 0
      %p37 = por %p35, %p36
      %p38 = scmp.ne.s32.totalorder %s27, %s30
      %p39 = scmp.eq.s32.totalorder %s22, 1
      %p40 = por %p38, %p39
      %p41 = scmp.ne.s32.totalorder %s30, %s31
      %p42 = scmp.eq.s32.totalorder %s22, 0
      %p43 = por %p41, %p42
      %p44 = scmp.ne.s32.totalorder %s30, %s31
      %p45 = scmp.eq.s32.totalorder %s23, 1
      %p46 = por %p44, %p45
      %p48 = scmp.ne.s32.totalorder %s31, %s47
      %p49 = scmp.eq.s32.totalorder %s23, 0
      %p50 = por %p48, %p49
      %s52 = sadd.s32 %s51, 1
      %p55 = scmp.eq.s32.totalorder %s17, 1
      %p56 = scmp.ne.s32.totalorder %s51, %s53
      %p57 = scmp.eq.s32.totalorder %s17, 0
      %p58 = por %p56, %p57
      %p59 = scmp.ne.s32.totalorder %s51, %s53
      %p60 = scmp.eq.s32.totalorder %s22, 1
      %p61 = por %p59, %p60
      %p62 = scmp.ne.s32.totalorder %s53, %s54
      %p63 = scmp.eq.s32.totalorder %s22, 0
      %p64 = por %p62, %p63
      %p65 = scmp.ne.s32.totalorder %s53, %s54
      %p66 = scmp.eq.s32.totalorder %s23, 1
      %p67 = por %p65, %p66
      %p69 = scmp.ne.s32.totalorder %s54, %s68
      %p70 = scmp.eq.s32.totalorder %s23, 0
      %p71 = por %p69, %p70
      %s73 = sadd.s32 %s72, 1
      %p76 = scmp.eq.s32.totalorder %s17, 1
      %p77 = scmp.ne.s32.totalorder %s72, %s74
      %p78 = scmp.eq.s32.totalorder %s17, 0
      %p79 = por %p77, %p78
      %p80 = scmp.ne.s32.totalorder %s72, %s74
      %p81 = scmp.eq.s32.totalorder %s22, 1
      %p82 = por %p80, %p81
      %p83 = scmp.ne.s32.totalorder %s74, %s75
      %p84 = scmp.eq.s32.totalorder %s22, 0
      %p85 = por %p83, %p84
      %p86 = scmp.ne.s32.totalorder %s74, %s75
      %p87 = scmp.eq.s32.totalorder %s23, 1
      %p88 = por %p86, %p87
      %p90 = scmp.ne.s32.totalorder %s75, %s89
      %p91 = scmp.eq.s32.totalorder %s23, 0
      %p92 = por %p90, %p91
      %s94 = sadd.s32 %s93, 1
      %p97 = scmp.eq.s32.totalorder %s17, 1
      %p98 = scmp.ne.s32.totalorder %s93, %s95
      %p99 = scmp.eq.s32.totalorder %s17, 0
      %p100 = por %p98, %p99
      %p101 = scmp.ne.s32.totalorder %s93, %s95
      %p102 = scmp.eq.s32.totalorder %s22, 1
      %p103 = por %p101, %p102
      %p104 = scmp.ne.s32.totalorder %s95, %s96
      %p105 = scmp.eq.s32.totalorder %s22, 0
      %p106 = por %p104, %p105
      %p107 = scmp.ne.s32.totalorder %s95, %s96
      %p108 = scmp.eq.s32.totalorder %s23, 1
      %p109 = por %p107, %p108
      %p111 = scmp.ne.s32.totalorder %s96, %s110
      %p112 = scmp.eq.s32.totalorder %s23, 0
      %p113 = por %p111, %p112
      %s115 = sadd.s32 %s114, 1
      %p118 = scmp.eq.s32.totalorder %s17, 1
      %p119 = scmp.ne.s32.totalorder %s114, %s116
      %p120 = scmp.eq.s32.totalorder %s17, 0
      %p121 = por %p119, %p120
      %p122 = scmp.ne.s32.totalorder %s114, %s116
      %p123 = scmp.eq.s32.totalorder %s22, 1
      %p124 = por %p122, %p123
      %p125 = scmp.ne.s32.totalorder %s116, %s117
      %p126 = scmp.eq.s32.totalorder %s22, 0
      %p127 = por %p125, %p126
      %p128 = scmp.ne.s32.totalorder %s116, %s117
      %p129 = scmp.eq.s32.totalorder %s23, 1
      %p130 = por %p128, %p129
      %p132 = scmp.ne.s32.totalorder %s117, %s131
      %p133 = scmp.eq.s32.totalorder %s23, 0
      %p134 = por %p132, %p133
      %s136 = sadd.s32 %s135, 1
      %p139 = scmp.eq.s32.totalorder %s17, 1
      %p140 = scmp.ne.s32.totalorder %s135, %s137
      %p141 = scmp.eq.s32.totalorder %s17, 0
      %p142 = por %p140, %p141
      %p143 = scmp.ne.s32.totalorder %s135, %s137
      %p144 = scmp.eq.s32.totalorder %s22, 1
      %p145 = por %p143, %p144
      %p146 = scmp.ne.s32.totalorder %s137, %s138
      %p147 = scmp.eq.s32.totalorder %s22, 0
      %p148 = por %p146, %p147
      %p149 = scmp.ne.s32.totalorder %s137, %s138
      %p150 = scmp.eq.s32.totalorder %s23, 1
      %p151 = por %p149, %p150
      %p153 = scmp.ne.s32.totalorder %s138, %s152
      %p154 = scmp.eq.s32.totalorder %s23, 0
      %p155 = por %p153, %p154
      %s157 = sadd.s32 %s156, 1
      %p160 = scmp.eq.s32.totalorder %s17, 1
      %p161 = scmp.ne.s32.totalorder %s156, %s158
      %p162 = scmp.eq.s32.totalorder %s17, 0
      %p163 = por %p161, %p162
      %p164 = scmp.ne.s32.totalorder %s156, %s158
      %p165 = scmp.eq.s32.totalorder %s22, 1
      %p166 = por %p164, %p165
      %p167 = scmp.ne.s32.totalorder %s158, %s159
      %p168 = scmp.eq.s32.totalorder %s22, 0
      %p169 = por %p167, %p168
      %p170 = scmp.ne.s32.totalorder %s158, %s159
      %p171 = scmp.eq.s32.totalorder %s23, 1
      %p172 = por %p170, %p171
      %p174 = scmp.ne.s32.totalorder %s159, %s173
      %p175 = scmp.eq.s32.totalorder %s23, 0
      %p176 = por %p174, %p175
      %s178 = sadd.s32 %s177, 1
      %p181 = scmp.eq.s32.totalorder %s17, 1
      %p182 = scmp.ne.s32.totalorder %s177, %s179
      %p183 = scmp.eq.s32.totalorder %s17, 0
      %p184 = por %p182, %p183
      %p185 = scmp.ne.s32.totalorder %s177, %s179
      %p186 = scmp.eq.s32.totalorder %s22, 1
      %p187 = por %p185, %p186
      %p188 = scmp.ne.s32.totalorder %s179, %s180
      %p189 = scmp.eq.s32.totalorder %s22, 0
      %p190 = por %p188, %p189
      %p191 = scmp.ne.s32.totalorder %s179, %s180
      %p192 = scmp.eq.s32.totalorder %s23, 1
      %p193 = por %p191, %p192
      %p195 = scmp.ne.s32.totalorder %s180, %s194
      %p196 = scmp.eq.s32.totalorder %s23, 0
      %p197 = por %p195, %p196
      %s199 = sadd.s32 %s198, 1
      %p202 = scmp.eq.s32.totalorder %s17, 1
      %p203 = scmp.ne.s32.totalorder %s198, %s200
      %p204 = scmp.eq.s32.totalorder %s17, 0
      %p205 = por %p203, %p204
      %p206 = scmp.ne.s32.totalorder %s198, %s200
      %p207 = scmp.eq.s32.totalorder %s22, 1
      %p208 = por %p206, %p207
      %p209 = scmp.ne.s32.totalorder %s200, %s201
      %p210 = scmp.eq.s32.totalorder %s22, 0
      %p211 = por %p209, %p210
      %p212 = scmp.ne.s32.totalorder %s200, %s201
      %p213 = scmp.eq.s32.totalorder %s23, 1
      %p214 = por %p212, %p213
      %p216 = scmp.ne.s32.totalorder %s201, %s215
      %p217 = scmp.eq.s32.totalorder %s23, 0
      %p218 = por %p216, %p217
      %s219 = ssub.s32 %s17, %s24
      %p220 = scmp.eq.s32.totalorder %s219, 0
      %s222 = sadd.s32 %s221, 1
      %s223 = scalar_select %p220, %s221, %s222
      %p226 = pneg %p220
      %p227 = scmp.eq.s32.totalorder %s17, 1
      %p228 = por %p226, %p227
      %p229 = scmp.ne.s32.totalorder %s221, %s224
      %p230 = scmp.eq.s32.totalorder %s17, 0
      %p231 = por %p229, %p230
      %p232 = scmp.ne.s32.totalorder %s221, %s224
      %p233 = scmp.eq.s32.totalorder %s22, 1
      %p234 = por %p232, %p233
      %p235 = scmp.ne.s32.totalorder %s224, %s225
      %p236 = scmp.eq.s32.totalorder %s22, 0
      %p237 = por %p235, %p236
      %p238 = scmp.ne.s32.totalorder %s224, %s225
      %p239 = scmp.eq.s32.totalorder %s23, 1
      %p240 = por %p238, %p239
      %p242 = scmp.ne.s32.totalorder %s225, %s241
      %p243 = scmp.eq.s32.totalorder %s23, 0
      %p244 = por %p242, %p243
      %p245 = scmp.le.s32.totalorder 1, %s17
      %p246 = scmp.lt.s32.totalorder %s17, 3
      %p247 = pnand %p245, %p246
      %p248 = pneg %p247
      // Predicated region
      $region9: #{tpu_custom_call.1} parent=5 // pred_check
        _
      $region10: #{tpu_custom_call.1} parent=5 // pred_check_branch
        %250 = sbr.rel (%p247) target = $region12
      $region11: #{tpu_custom_call.1} parent=5 // pred_region
        %s251 = ssub.s32 %s17, 1
        // Predicated region
        $region13: #{tpu_custom_call.1} parent=11 // pred_check
          %p252 = pneg %p64
        $region14: #{tpu_custom_call.1} parent=11 // pred_check_branch
          %254 = sbr.rel (%p252) target = $region16
        $region15: #{tpu_custom_call.1} parent=11 // pred_region
          _
        $region16: #{tpu_custom_call.1} parent=11 // pred_fallthru
          _
        // Predicated region
        $region17: #{tpu_custom_call.1} parent=11 // pred_check
          %p255 = pneg %p85
        $region18: #{tpu_custom_call.1} parent=11 // pred_check_branch
          %257 = sbr.rel (%p255) target = $region20
        $region19: #{tpu_custom_call.1} parent=11 // pred_region
          _
        $region20: #{tpu_custom_call.1} parent=11 // pred_fallthru
          _
        // Predicated region
        $region21: #{tpu_custom_call.1} parent=11 // pred_check
          %p258 = pneg %p106
        $region22: #{tpu_custom_call.1} parent=11 // pred_check_branch
          %260 = sbr.rel (%p258) target = $region24
        $region23: #{tpu_custom_call.1} parent=11 // pred_region
          _
        $region24: #{tpu_custom_call.1} parent=11 // pred_fallthru
          _
        // Predicated region
        $region25: #{tpu_custom_call.1} parent=11 // pred_check
          %p261 = pneg %p127
        $region26: #{tpu_custom_call.1} parent=11 // pred_check_branch
          %263 = sbr.rel (%p261) target = $region28
        $region27: #{tpu_custom_call.1} parent=11 // pred_region
          _
        $region28: #{tpu_custom_call.1} parent=11 // pred_fallthru
          _
        // Predicated region
        $region29: #{tpu_custom_call.1} parent=11 // pred_check
          %p264 = pneg %p148
        $region30: #{tpu_custom_call.1} parent=11 // pred_check_branch
          %266 = sbr.rel (%p264) target = $region32
        $region31: #{tpu_custom_call.1} parent=11 // pred_region
          _
        $region32: #{tpu_custom_call.1} parent=11 // pred_fallthru
          _
        // Predicated region
        $region33: #{tpu_custom_call.1} parent=11 // pred_check
          %p267 = pneg %p169
        $region34: #{tpu_custom_call.1} parent=11 // pred_check_branch
          %269 = sbr.rel (%p267) target = $region36
        $region35: #{tpu_custom_call.1} parent=11 // pred_region
          _
        $region36: #{tpu_custom_call.1} parent=11 // pred_fallthru
          _
        // Predicated region
        $region37: #{tpu_custom_call.1} parent=11 // pred_check
          %p270 = pneg %p190
        $region38: #{tpu_custom_call.1} parent=11 // pred_check_branch
          %272 = sbr.rel (%p270) target = $region40
        $region39: #{tpu_custom_call.1} parent=11 // pred_region
          _
        $region40: #{tpu_custom_call.1} parent=11 // pred_fallthru
          _
        // Predicated region
        $region41: #{tpu_custom_call.1} parent=11 // pred_check
          %p273 = pneg %p211
        $region42: #{tpu_custom_call.1} parent=11 // pred_check_branch
          %275 = sbr.rel (%p273) target = $region44
        $region43: #{tpu_custom_call.1} parent=11 // pred_region
          _
        $region44: #{tpu_custom_call.1} parent=11 // pred_fallthru
          _
      $region12: #{tpu_custom_call.1} parent=5 // pred_fallthru
        _
      %p276 = scmp.lt.s32.totalorder %s17, 2
      // Predicated region
      $region45: #{tpu_custom_call.1} parent=5 // pred_check
        %p277 = pneg %p276
      $region46: #{tpu_custom_call.1} parent=5 // pred_check_branch
        %279 = sbr.rel (%p277) target = $region48
      $region47: #{tpu_custom_call.1} parent=5 // pred_region
        // Predicated region
        $region49: #{tpu_custom_call.1} parent=47 // pred_check
          %p280 = pneg %p37
        $region50: #{tpu_custom_call.1} parent=47 // pred_check_branch
          %282 = sbr.rel (%p280) target = $region52
        $region51: #{tpu_custom_call.1} parent=47 // pred_region
          %s283 = sand.u32 %s27, 1
          %s284 = sand.u32 %s27, 1
          %s285 = smul.addr %s284, 32
          %s286 = scalar_lea.vmem [#allocation5], %s285
          %s287 = smul.addr %s17, 4
          %s288 = scalar_lea.vmem %s0, %s287
          // Predicated region
          $region53: #{tpu_custom_call.1} parent=51 // pred_check
            _
          $region54: #{tpu_custom_call.1} parent=51 // pred_check_branch
            %290 = sbr.rel (0) target = $region56
          $region55: #{tpu_custom_call.1} parent=51 // pred_region
            // Predicated region
            $region57: #{tpu_custom_call.1} parent=55 // pred_check
              _
            $region58: #{tpu_custom_call.1} parent=55 // pred_check_branch
              %292 = sbr.rel target = $region60
            $region59: #{tpu_custom_call.1} parent=55 // pred_region
              // Predicated region
              $region72: #{tpu_custom_call.1} parent=59 // pred_check
                _
              $region73: #{tpu_custom_call.1} parent=59 // pred_check_branch
                %321 = sbr.rel (0) target = $region75
              $region74: #{tpu_custom_call.1} parent=59 // pred_region
                loop: start=0, step=1, limit=1
                $region76: #{tpu_custom_call.1} parent=74 // loop_pre_header
                  _
                $region77: #{tpu_custom_call.1} parent=74 // loop_header
                  %s323 = sphi 0, %s327
                  %p324 = scmp.ge.s32.totalorder %s323, 1
                  %s328 = sphi %s288, %s288
                  %s329 = sphi %s286, %s286
                $region78: #{tpu_custom_call.1} parent=74 // loop_header_branch
                  %326 = sbr.rel (%p324) target = $region82
                $region79: #{tpu_custom_call.1} parent=74 // loop_body
                  _
                $region80: #{tpu_custom_call.1} parent=74 // loop_footer
                  %s327 = sadd.s32 1, %s323
                $region81: #{tpu_custom_call.1} parent=74 // loop_footer_branch
                  %322 = sbr.rel target = $region77
                $region82: #{tpu_custom_call.1} parent=74 // loop_exit
                  _
                loop: start=0, step=1, limit=1
                $region83: #{tpu_custom_call.1} parent=74 // loop_pre_header
                  _
                $region84: #{tpu_custom_call.1} parent=74 // loop_header
                  %s332 = sphi 0, %s336
                  %p333 = scmp.ge.s32.totalorder %s332, 1
                  %s337 = sphi %s288, %s288
                  %s338 = sphi %s286, %s286
                $region85: #{tpu_custom_call.1} parent=74 // loop_header_branch
                  %335 = sbr.rel (%p333) target = $region89
                $region86: #{tpu_custom_call.1} parent=74 // loop_body
                  %v339 = vld [vmem:[%s337] sm:$0xf]
                  %340 = vst [vmem:[%s338] sm:$0xf] %v339
                  %v341 = vld [vmem:[%s337 + $0x8] sm:$0xf]
                  %342 = vst [vmem:[%s338 + $0x4] sm:$0xf] %v341
                  %v343 = vld [vmem:[%s337 + $0x10] sm:$0xf]
                  %344 = vst [vmem:[%s338 + $0x8] sm:$0xf] %v343
                  %v345 = vld [vmem:[%s337 + $0x18] sm:$0xf]
                  %346 = vst [vmem:[%s338 + $0xc] sm:$0xf] %v345
                  %v347 = vld [vmem:[%s337 + $0x20] sm:$0xf]
                  %348 = vst [vmem:[%s338 + $0x10] sm:$0xf] %v347
                  %v349 = vld [vmem:[%s337 + $0x28] sm:$0xf]
                  %350 = vst [vmem:[%s338 + $0x14] sm:$0xf] %v349
                  %v351 = vld [vmem:[%s337 + $0x30] sm:$0xf]
                  %352 = vst [vmem:[%s338 + $0x18] sm:$0xf] %v351
                  %v353 = vld [vmem:[%s337 + $0x38] sm:$0xf]
                  %354 = vst [vmem:[%s338 + $0x1c] sm:$0xf] %v353
                $region87: #{tpu_custom_call.1} parent=74 // loop_footer
                  %s336 = sadd.s32 1, %s332
                $region88: #{tpu_custom_call.1} parent=74 // loop_footer_branch
                  %331 = sbr.rel target = $region84
                $region89: #{tpu_custom_call.1} parent=74 // loop_exit
                  _
              $region75: #{tpu_custom_call.1} parent=59 // pred_fallthru
                _
            $region60: #{tpu_custom_call.1} parent=55 // pred_fallthru
              _
            // Predicated region
            $region61: #{tpu_custom_call.1} parent=55 // pred_check
              _
            $region62: #{tpu_custom_call.1} parent=55 // pred_check_branch
              %294 = sbr.rel (0) target = $region64
            $region63: #{tpu_custom_call.1} parent=55 // pred_region
              loop: start=0, step=1, limit=1
              $region65: #{tpu_custom_call.1} parent=63 // loop_pre_header
                _
              $region66: #{tpu_custom_call.1} parent=63 // loop_header
                %s297 = sphi 0, %s301
                %p298 = scmp.ge.s32.totalorder %s297, 1
                %s302 = sphi %s288, %s288
                %s303 = sphi %s286, %s286
              $region67: #{tpu_custom_call.1} parent=63 // loop_header_branch
                %300 = sbr.rel (%p298) target = $region71
              $region68: #{tpu_custom_call.1} parent=63 // loop_body
                %v304 = vld [vmem:[%s302] sm:$0xf]
                %305 = vst [vmem:[%s303] sm:$0xf] %v304
                %v306 = vld [vmem:[%s302 + $0x8] sm:$0xf]
                %307 = vst [vmem:[%s303 + $0x4] sm:$0xf] %v306
                %v308 = vld [vmem:[%s302 + $0x10] sm:$0xf]
                %309 = vst [vmem:[%s303 + $0x8] sm:$0xf] %v308
                %v310 = vld [vmem:[%s302 + $0x18] sm:$0xf]
                %311 = vst [vmem:[%s303 + $0xc] sm:$0xf] %v310
                %v312 = vld [vmem:[%s302 + $0x20] sm:$0xf]
                %313 = vst [vmem:[%s303 + $0x10] sm:$0xf] %v312
                %v314 = vld [vmem:[%s302 + $0x28] sm:$0xf]
                %315 = vst [vmem:[%s303 + $0x14] sm:$0xf] %v314
                %v316 = vld [vmem:[%s302 + $0x30] sm:$0xf]
                %317 = vst [vmem:[%s303 + $0x18] sm:$0xf] %v316
                %v318 = vld [vmem:[%s302 + $0x38] sm:$0xf]
                %319 = vst [vmem:[%s303 + $0x1c] sm:$0xf] %v318
              $region69: #{tpu_custom_call.1} parent=63 // loop_footer
                %s301 = sadd.s32 1, %s297
              $region70: #{tpu_custom_call.1} parent=63 // loop_footer_branch
                %296 = sbr.rel target = $region66
              $region71: #{tpu_custom_call.1} parent=63 // loop_exit
                _
            $region64: #{tpu_custom_call.1} parent=55 // pred_fallthru
              _
          $region56: #{tpu_custom_call.1} parent=51 // pred_fallthru
            _
          %355 = vnop
        $region52: #{tpu_custom_call.1} parent=47 // pred_fallthru
          _
      $region48: #{tpu_custom_call.1} parent=5 // pred_fallthru
        _
      %p356 = scmp.le.s32.totalorder 1, %s17
      %p357 = scmp.lt.s32.totalorder %s17, 3
      %p358 = pnand %p356, %p357
      %p359 = pneg %p358
      // Predicated region
      $region90: #{tpu_custom_call.1} parent=5 // pred_check
        _
      $region91: #{tpu_custom_call.1} parent=5 // pred_check_branch
        %361 = sbr.rel (%p358) target = $region93
      $region92: #{tpu_custom_call.1} parent=5 // pred_region
        %s362 = ssub.s32 %s17, 1
        %s363 = sand.u32 %s30, 1
        %s364 = sand.u32 %s30, 1
        %s365 = smul.addr %s364, 32
        %s366 = scalar_lea.vmem [#allocation5], %s365
        // Predicated region
        $region94: #{tpu_custom_call.1} parent=92 // pred_check
          %p367 = pneg %p43
        $region95: #{tpu_custom_call.1} parent=92 // pred_check_branch
          %369 = sbr.rel (%p367) target = $region97
        $region96: #{tpu_custom_call.1} parent=92 // pred_region
          _
        $region97: #{tpu_custom_call.1} parent=92 // pred_fallthru
          _
        %s370 = sand.u32 %s30, 1
        %s371 = sand.u32 %s30, 1
        %s372 = smul.addr %s371, 32
        %s373 = scalar_lea.vmem [#allocation5], %s372
        %p374 = pneg %p43
        %p375 = pneg %p40
        %p376 = pneg %p64
        %p377 = pneg %p61
        %p378 = pneg %p85
        %p379 = pneg %p82
        %p380 = pneg %p106
        %p381 = pneg %p103
        %p382 = pneg %p127
        %p383 = pneg %p124
        %p384 = pneg %p148
        %p385 = pneg %p145
        %p386 = pneg %p169
        %p387 = pneg %p166
        %p388 = pneg %p190
        %p389 = pneg %p187
        %p390 = pneg %p211
        %p391 = pneg %p208
        %p392 = pneg %p237
        %p393 = pneg %p234
        %p394 = scmp.lt.s32.totalorder %s22, 1
        %s395 = scalar_select %p394, %s22, 1
        %s396 = smul.addr %s395, 8
        %s397 = scalar_lea.vmem %s9, %s396
        %p398 = scmp.lt.s32.totalorder %s22, 1
        %s399 = scalar_select %p398, %s22, 1
        %s400 = smul.addr %s399, 8
        %s401 = scalar_lea.vmem %s9, %s400
        %v403 = vld [vmem:[%s1] sm:$0xf]
        %v404 = vld [vmem:[%s1 + $0x4] sm:$0xf]
        %v405 = vld [vmem:[%s1 + $0x8] sm:$0xf]
        %v406 = vld [vmem:[%s1 + $0xc] sm:$0xf]
        %v407 = vld [vmem:[%s366] sm:$0xf]
        %v408 = vunpack.c.l.bf16 %v407
        %v409 = vxor.u32 %v408, 2147483648
        %v410 = vmul.f32 %v409, 1.442695
        %v411 = vpow.pop %v410
        %v412 = vadd.f32 %v411, 1.0
        %v413 = vrcp.pop %v412
        %v414 = vmul.f32 1.0, %v413
        %v415 = vtanh.pop %v408
        %v416 = vmul.f32 %v414, 0.0
        %418 = vrot.lane.b32.xlu0 %v415, 32
        %v419 = vpop.permute.xlu0 %418
        %v421 = vmul.f32 %v414, %v419
        %423 = vrot.lane.b32.xlu0 %v421, 32
        %v424 = vpop.permute.xlu0 %423
        %v426 = vadd.f32 %v416, %v424
        %v427 = vtanh.pop %v426
        %429 = vrot.lane.b32.xlu0 %v427, 32
        %v430 = vpop.permute.xlu0 %429
        %v432 = vmul.f32 %v414, %v430
        %434 = vrot.lane.b32.xlu0 %v426, 96
        %v435 = vpop.permute.xlu0 %434
        %vm437 = vcmask 261120
        %438 = vst.msk [vmem:[#allocation2] sm:$0xff] %vm437, %v435
        %v439 = vpack.c.bf16 %v432, %v432
        %v441 = vunpack.c.l.b16 %v439
        %v442 = vpack.c.b16 %v441, %v441
        %443 = vrot.lane.b32.xlu0 %v442, 64
        %v444 = vpop.permute.xlu0 %443
        %vm446 = vcmask 257024
        %447 = vst.msk [vmem:[#allocation3] sm:$0xf] %vm446, %v444
        %s448 = scalar_lea.vmem %s366, 4 [#allocation5]
        %v449 = vld [vmem:[%s448] sm:$0xf]
        %v450 = vunpack.c.l.bf16 %v449
        %451 = vrot.lane.b32.xlu0 %v439, 64
        %v452 = vpop.permute.xlu0 %451
        %v457 = vunpack.c.l.b16 %v403
        %v458 = vunpack.c.l.b16 %v404
        %v459 = vunpack.c.l.b16 %v405
        %v460 = vunpack.c.l.b16 %v406
        %v461 = vpack.c.b16 %v458, %v457
        %v462 = vpack.c.b16 %v460, %v459
        %v466 = vsel %vm437, %v452, 0
        %468 = vmatprep.subr.bf16.mxu0 0
        %469 = vmatpush1.bf16.msra.mxu0 %v461
        %470 = vmatprep.subr.bf16.mxu0 0
        %471 = vmatpush1.bf16.msra.mxu0 %v462
        %472 = vmatprep.subr.bf16.mxu0 0
        %473 = vmatpush1.bf16.msra.mxu0 0
        %474 = vmatprep.subr.bf16.mxu0 0
        %475 = vmatpush1.bf16.msra.mxu0 0
        %476 = vmatprep.subr.bf16.mxu0 0
        %477 = vmatpush1.bf16.msra.mxu0 0
        %478 = vmatprep.subr.bf16.mxu0 0
        %479 = vmatpush1.bf16.msra.mxu0 0
        %480 = vmatprep.subr.bf16.mxu0 0
        %481 = vmatpush1.bf16.msra.mxu0 0
        %482 = vmatprep.subr.bf16.mxu0 0
        %483 = vmatpush1.bf16.msra.mxu0 0
        %484 = vmatprep.subr.bf16.mxu0 0
        %485 = vmatpush1.bf16.msra.mxu0 0
        %486 = vmatprep.subr.bf16.mxu0 0
        %487 = vmatpush1.bf16.msra.mxu0 0
        %488 = vmatprep.subr.bf16.mxu0 0
        %489 = vmatpush1.bf16.msra.mxu0 0
        %490 = vmatprep.subr.bf16.mxu0 0
        %491 = vmatpush1.bf16.msra.mxu0 0
        %492 = vmatprep.subr.bf16.mxu0 0
        %493 = vmatpush1.bf16.msra.mxu0 0
        %494 = vmatprep.subr.bf16.mxu0 0
        %495 = vmatpush1.bf16.msra.mxu0 0
        %496 = vmatprep.subr.bf16.mxu0 0
        %497 = vmatpush1.bf16.msra.mxu0 0
        %498 = vmatprep.subr.bf16.mxu0 0
        %499 = vmatpush1.bf16.msra.mxu0 0
        %500 = vmatprep.mubr.bf16.mxu0 0
        %501 = vmatmul.mubr.bf16.gmra.mrb[0].mxu0 %v466
        %v502 = vpop.f32.mrb[0].mxu0
        %v503 = vadd.f32 0.0, %v502
        %v504 = vpop.f32.mrb[0].mxu0
        %v505 = vpop.f32.mrb[0].mxu0
        %v506 = vpop.f32.mrb[0].mxu0
        %507 = vdwg.mxu0
        %v508 = vadd.f32 %v450, %v503
        %v509 = vld [vmem:[#allocation2] sm:$0xff]
        %v510 = vxor.u32 %v508, 2147483648
        %v511 = vmul.f32 %v510, 1.442695
        %v512 = vpow.pop %v511
        %v513 = vadd.f32 %v512, 1.0
        %v514 = vrcp.pop %v513
        %v515 = vmul.f32 1.0, %v514
        %v516 = vtanh.pop %v508
        %518 = vrot.lane.b32.xlu0 %v509, 32
        %v519 = vpop.permute.xlu0 %518
        %v521 = vmul.f32 %v515, %v519
        %523 = vrot.lane.b32.xlu0 %v516, 32
        %v524 = vpop.permute.xlu0 %523
        %v526 = vmul.f32 %v515, %v524
        %528 = vrot.lane.b32.xlu0 %v526, 32
        %v529 = vpop.permute.xlu0 %528
        %v531 = vadd.f32 %v521, %v529
        %v532 = vtanh.pop %v531
        %534 = vrot.lane.b32.xlu0 %v532, 32
        %v535 = vpop.permute.xlu0 %534
        %v537 = vmul.f32 %v515, %v535
        %539 = vrot.lane.b32.xlu0 %v531, 96
        %v540 = vpop.permute.xlu0 %539
        %542 = vst.msk [vmem:[#allocation2] sm:$0xff] %vm437, %v540
        %v543 = vpack.c.bf16 %v537, %v537
        %v545 = vunpack.c.l.b16 %v543
        %v546 = vpack.c.b16 %v545, %v545
        %547 = vrot.lane.b32.xlu0 %v546, 64
        %v548 = vpop.permute.xlu0 %547
        %s550 = scalar_lea.vmem [#allocation3], 4
        %551 = vst.msk [vmem:[%s550] sm:$0xf] %vm446, %v548
        %s552 = scalar_lea.vmem %s366, 8 [#allocation5]
        %v553 = vld [vmem:[%s552] sm:$0xf]
        %v554 = vunpack.c.l.bf16 %v553
        %555 = vrot.lane.b32.xlu0 %v543, 64
        %v556 = vpop.permute.xlu0 %555
        %v558 = vsel %vm437, %v556, 0
        %560 = vmatprep.subr.bf16.mxu0 0
        %561 = vmatpush1.bf16.msra.mxu0 %v461
        %562 = vmatprep.subr.bf16.mxu0 0
        %563 = vmatpush1.bf16.msra.mxu0 %v462
        %564 = vmatprep.subr.bf16.mxu0 0
        %565 = vmatpush1.bf16.msra.mxu0 0
        %566 = vmatprep.subr.bf16.mxu0 0
        %567 = vmatpush1.bf16.msra.mxu0 0
        %568 = vmatprep.subr.bf16.mxu0 0
        %569 = vmatpush1.bf16.msra.mxu0 0
        %570 = vmatprep.subr.bf16.mxu0 0
        %571 = vmatpush1.bf16.msra.mxu0 0
        %572 = vmatprep.subr.bf16.mxu0 0
        %573 = vmatpush1.bf16.msra.mxu0 0
        %574 = vmatprep.subr.bf16.mxu0 0
        %575 = vmatpush1.bf16.msra.mxu0 0
        %576 = vmatprep.subr.bf16.mxu0 0
        %577 = vmatpush1.bf16.msra.mxu0 0
        %578 = vmatprep.subr.bf16.mxu0 0
        %579 = vmatpush1.bf16.msra.mxu0 0
        %580 = vmatprep.subr.bf16.mxu0 0
        %581 = vmatpush1.bf16.msra.mxu0 0
        %582 = vmatprep.subr.bf16.mxu0 0
        %583 = vmatpush1.bf16.msra.mxu0 0
        %584 = vmatprep.subr.bf16.mxu0 0
        %585 = vmatpush1.bf16.msra.mxu0 0
        %586 = vmatprep.subr.bf16.mxu0 0
        %587 = vmatpush1.bf16.msra.mxu0 0
        %588 = vmatprep.subr.bf16.mxu0 0
        %589 = vmatpush1.bf16.msra.mxu0 0
        %590 = vmatprep.subr.bf16.mxu0 0
        %591 = vmatpush1.bf16.msra.mxu0 0
        %592 = vmatprep.mubr.bf16.mxu0 0
        %593 = vmatmul.mubr.bf16.gmra.mrb[0].mxu0 %v558
        %v594 = vpop.f32.mrb[0].mxu0
        %v595 = vadd.f32 0.0, %v594
        %v596 = vpop.f32.mrb[0].mxu0
        %v597 = vpop.f32.mrb[0].mxu0
        %v598 = vpop.f32.mrb[0].mxu0
        %599 = vdwg.mxu0
        %v600 = vadd.f32 %v554, %v595
        %v601 = vld [vmem:[#allocation2] sm:$0xff]
        %v602 = vxor.u32 %v600, 2147483648
        %v603 = vmul.f32 %v602, 1.442695
        %v604 = vpow.pop %v603
        %v605 = vadd.f32 %v604, 1.0
        %v606 = vrcp.pop %v605
        %v607 = vmul.f32 1.0, %v606
        %v608 = vtanh.pop %v600
        %610 = vrot.lane.b32.xlu0 %v601, 32
        %v611 = vpop.permute.xlu0 %610
        %v613 = vmul.f32 %v607, %v611
        %615 = vrot.lane.b32.xlu0 %v608, 32
        %v616 = vpop.permute.xlu0 %615
        %v618 = vmul.f32 %v607, %v616
        %620 = vrot.lane.b32.xlu0 %v618, 32
        %v621 = vpop.permute.xlu0 %620
        %v623 = vadd.f32 %v613, %v621
        %v624 = vtanh.pop %v623
        %626 = vrot.lane.b32.xlu0 %v624, 32
        %v627 = vpop.permute.xlu0 %626
        %v629 = vmul.f32 %v607, %v627
        %631 = vrot.lane.b32.xlu0 %v623, 96
        %v632 = vpop.permute.xlu0 %631
        %634 = vst.msk [vmem:[#allocation2] sm:$0xff] %vm437, %v632
        %v635 = vpack.c.bf16 %v629, %v629
        %v637 = vunpack.c.l.b16 %v635
        %v638 = vpack.c.b16 %v637, %v637
        %639 = vrot.lane.b32.xlu0 %v638, 64
        %v640 = vpop.permute.xlu0 %639
        %s642 = scalar_lea.vmem [#allocation3], 8
        %643 = vst.msk [vmem:[%s642] sm:$0xf] %vm446, %v640
        %s644 = scalar_lea.vmem %s366, 12 [#allocation5]
        %v645 = vld [vmem:[%s644] sm:$0xf]
        %v646 = vunpack.c.l.bf16 %v645
        %647 = vrot.lane.b32.xlu0 %v635, 64
        %v648 = vpop.permute.xlu0 %647
        %v650 = vsel %vm437, %v648, 0
        %652 = vmatprep.subr.bf16.mxu0 0
        %653 = vmatpush1.bf16.msra.mxu0 %v461
        %654 = vmatprep.subr.bf16.mxu0 0
        %655 = vmatpush1.bf16.msra.mxu0 %v462
        %656 = vmatprep.subr.bf16.mxu0 0
        %657 = vmatpush1.bf16.msra.mxu0 0
        %658 = vmatprep.subr.bf16.mxu0 0
        %659 = vmatpush1.bf16.msra.mxu0 0
        %660 = vmatprep.subr.bf16.mxu0 0
        %661 = vmatpush1.bf16.msra.mxu0 0
        %662 = vmatprep.subr.bf16.mxu0 0
        %663 = vmatpush1.bf16.msra.mxu0 0
        %664 = vmatprep.subr.bf16.mxu0 0
        %665 = vmatpush1.bf16.msra.mxu0 0
        %666 = vmatprep.subr.bf16.mxu0 0
        %667 = vmatpush1.bf16.msra.mxu0 0
        %668 = vmatprep.subr.bf16.mxu0 0
        %669 = vmatpush1.bf16.msra.mxu0 0
        %670 = vmatprep.subr.bf16.mxu0 0
        %671 = vmatpush1.bf16.msra.mxu0 0
        %672 = vmatprep.subr.bf16.mxu0 0
        %673 = vmatpush1.bf16.msra.mxu0 0
        %674 = vmatprep.subr.bf16.mxu0 0
        %675 = vmatpush1.bf16.msra.mxu0 0
        %676 = vmatprep.subr.bf16.mxu0 0
        %677 = vmatpush1.bf16.msra.mxu0 0
        %678 = vmatprep.subr.bf16.mxu0 0
        %679 = vmatpush1.bf16.msra.mxu0 0
        %680 = vmatprep.subr.bf16.mxu0 0
        %681 = vmatpush1.bf16.msra.mxu0 0
        %682 = vmatprep.subr.bf16.mxu0 0
        %683 = vmatpush1.bf16.msra.mxu0 0
        %684 = vmatprep.mubr.bf16.mxu0 0
        %685 = vmatmul.mubr.bf16.gmra.mrb[0].mxu0 %v650
        %v686 = vpop.f32.mrb[0].mxu0
        %v687 = vadd.f32 0.0, %v686
        %v688 = vpop.f32.mrb[0].mxu0
        %v689 = vpop.f32.mrb[0].mxu0
        %v690 = vpop.f32.mrb[0].mxu0
        %691 = vdwg.mxu0
        %v692 = vadd.f32 %v646, %v687
        %v693 = vld [vmem:[#allocation2] sm:$0xff]
        %v694 = vxor.u32 %v692, 2147483648
        %v695 = vmul.f32 %v694, 1.442695
        %v696 = vpow.pop %v695
        %v697 = vadd.f32 %v696, 1.0
        %v698 = vrcp.pop %v697
        %v699 = vmul.f32 1.0, %v698
        %v700 = vtanh.pop %v692
        %702 = vrot.lane.b32.xlu0 %v693, 32
        %v703 = vpop.permute.xlu0 %702
        %v705 = vmul.f32 %v699, %v703
        %707 = vrot.lane.b32.xlu0 %v700, 32
        %v708 = vpop.permute.xlu0 %707
        %v710 = vmul.f32 %v699, %v708
        %712 = vrot.lane.b32.xlu0 %v710, 32
        %v713 = vpop.permute.xlu0 %712
        %v715 = vadd.f32 %v705, %v713
        %v716 = vtanh.pop %v715
        %718 = vrot.lane.b32.xlu0 %v716, 32
        %v719 = vpop.permute.xlu0 %718
        %v721 = vmul.f32 %v699, %v719
        %723 = vrot.lane.b32.xlu0 %v715, 96
        %v724 = vpop.permute.xlu0 %723
        %726 = vst.msk [vmem:[#allocation2] sm:$0xff] %vm437, %v724
        %v727 = vpack.c.bf16 %v721, %v721
        %v729 = vunpack.c.l.b16 %v727
        %v730 = vpack.c.b16 %v729, %v729
        %731 = vrot.lane.b32.xlu0 %v730, 64
        %v732 = vpop.permute.xlu0 %731
        %s734 = scalar_lea.vmem [#allocation3], 12
        %735 = vst.msk [vmem:[%s734] sm:$0xf] %vm446, %v732
        %s736 = scalar_lea.vmem %s366, 16 [#allocation5]
        %v737 = vld [vmem:[%s736] sm:$0xf]
        %v738 = vunpack.c.l.bf16 %v737
        %739 = vrot.lane.b32.xlu0 %v727, 64
        %v740 = vpop.permute.xlu0 %739
        %v742 = vsel %vm437, %v740, 0
        %744 = vmatprep.subr.bf16.mxu0 0
        %745 = vmatpush1.bf16.msra.mxu0 %v461
        %746 = vmatprep.subr.bf16.mxu0 0
        %747 = vmatpush1.bf16.msra.mxu0 %v462
        %748 = vmatprep.subr.bf16.mxu0 0
        %749 = vmatpush1.bf16.msra.mxu0 0
        %750 = vmatprep.subr.bf16.mxu0 0
        %751 = vmatpush1.bf16.msra.mxu0 0
        %752 = vmatprep.subr.bf16.mxu0 0
        %753 = vmatpush1.bf16.msra.mxu0 0
        %754 = vmatprep.subr.bf16.mxu0 0
        %755 = vmatpush1.bf16.msra.mxu0 0
        %756 = vmatprep.subr.bf16.mxu0 0
        %757 = vmatpush1.bf16.msra.mxu0 0
        %758 = vmatprep.subr.bf16.mxu0 0
        %759 = vmatpush1.bf16.msra.mxu0 0
        %760 = vmatprep.subr.bf16.mxu0 0
        %761 = vmatpush1.bf16.msra.mxu0 0
        %762 = vmatprep.subr.bf16.mxu0 0
        %763 = vmatpush1.bf16.msra.mxu0 0
        %764 = vmatprep.subr.bf16.mxu0 0
        %765 = vmatpush1.bf16.msra.mxu0 0
        %766 = vmatprep.subr.bf16.mxu0 0
        %767 = vmatpush1.bf16.msra.mxu0 0
        %768 = vmatprep.subr.bf16.mxu0 0
        %769 = vmatpush1.bf16.msra.mxu0 0
        %770 = vmatprep.subr.bf16.mxu0 0
        %771 = vmatpush1.bf16.msra.mxu0 0
        %772 = vmatprep.subr.bf16.mxu0 0
        %773 = vmatpush1.bf16.msra.mxu0 0
        %774 = vmatprep.subr.bf16.mxu0 0
        %775 = vmatpush1.bf16.msra.mxu0 0
        %776 = vmatprep.mubr.bf16.mxu0 0
        %777 = vmatmul.mubr.bf16.gmra.mrb[0].mxu0 %v742
        %v778 = vpop.f32.mrb[0].mxu0
        %v779 = vadd.f32 0.0, %v778
        %v780 = vpop.f32.mrb[0].mxu0
        %v781 = vpop.f32.mrb[0].mxu0
        %v782 = vpop.f32.mrb[0].mxu0
        %783 = vdwg.mxu0
        %v784 = vadd.f32 %v738, %v779
        %v785 = vld [vmem:[#allocation2] sm:$0xff]
        %v786 = vxor.u32 %v784, 2147483648
        %v787 = vmul.f32 %v786, 1.442695
        %v788 = vpow.pop %v787
        %v789 = vadd.f32 %v788, 1.0
        %v790 = vrcp.pop %v789
        %v791 = vmul.f32 1.0, %v790
        %v792 = vtanh.pop %v784
        %794 = vrot.lane.b32.xlu0 %v785, 32
        %v795 = vpop.permute.xlu0 %794
        %v797 = vmul.f32 %v791, %v795
        %799 = vrot.lane.b32.xlu0 %v792, 32
        %v800 = vpop.permute.xlu0 %799
        %v802 = vmul.f32 %v791, %v800
        %804 = vrot.lane.b32.xlu0 %v802, 32
        %v805 = vpop.permute.xlu0 %804
        %v807 = vadd.f32 %v797, %v805
        %v808 = vtanh.pop %v807
        %810 = vrot.lane.b32.xlu0 %v808, 32
        %v811 = vpop.permute.xlu0 %810
        %v813 = vmul.f32 %v791, %v811
        %815 = vrot.lane.b32.xlu0 %v807, 96
        %v816 = vpop.permute.xlu0 %815
        %818 = vst.msk [vmem:[#allocation2] sm:$0xff] %vm437, %v816
        %v819 = vpack.c.bf16 %v813, %v813
        %v821 = vunpack.c.l.b16 %v819
        %v822 = vpack.c.b16 %v821, %v821
        %823 = vrot.lane.b32.xlu0 %v822, 64
        %v824 = vpop.permute.xlu0 %823
        %s826 = scalar_lea.vmem [#allocation3], 16
        %827 = vst.msk [vmem:[%s826] sm:$0xf] %vm446, %v824
        %s828 = scalar_lea.vmem %s366, 20 [#allocation5]
        %v829 = vld [vmem:[%s828] sm:$0xf]
        %v830 = vunpack.c.l.bf16 %v829
        %831 = vrot.lane.b32.xlu0 %v819, 64
        %v832 = vpop.permute.xlu0 %831
        %v834 = vsel %vm437, %v832, 0
        %836 = vmatprep.subr.bf16.mxu0 0
        %837 = vmatpush1.bf16.msra.mxu0 %v461
        %838 = vmatprep.subr.bf16.mxu0 0
        %839 = vmatpush1.bf16.msra.mxu0 %v462
        %840 = vmatprep.subr.bf16.mxu0 0
        %841 = vmatpush1.bf16.msra.mxu0 0
        %842 = vmatprep.subr.bf16.mxu0 0
        %843 = vmatpush1.bf16.msra.mxu0 0
        %844 = vmatprep.subr.bf16.mxu0 0
        %845 = vmatpush1.bf16.msra.mxu0 0
        %846 = vmatprep.subr.bf16.mxu0 0
        %847 = vmatpush1.bf16.msra.mxu0 0
        %848 = vmatprep.subr.bf16.mxu0 0
        %849 = vmatpush1.bf16.msra.mxu0 0
        %850 = vmatprep.subr.bf16.mxu0 0
        %851 = vmatpush1.bf16.msra.mxu0 0
        %852 = vmatprep.subr.bf16.mxu0 0
        %853 = vmatpush1.bf16.msra.mxu0 0
        %854 = vmatprep.subr.bf16.mxu0 0
        %855 = vmatpush1.bf16.msra.mxu0 0
        %856 = vmatprep.subr.bf16.mxu0 0
        %857 = vmatpush1.bf16.msra.mxu0 0
        %858 = vmatprep.subr.bf16.mxu0 0
        %859 = vmatpush1.bf16.msra.mxu0 0
        %860 = vmatprep.subr.bf16.mxu0 0
        %861 = vmatpush1.bf16.msra.mxu0 0
        %862 = vmatprep.subr.bf16.mxu0 0
        %863 = vmatpush1.bf16.msra.mxu0 0
        %864 = vmatprep.subr.bf16.mxu0 0
        %865 = vmatpush1.bf16.msra.mxu0 0
        %866 = vmatprep.subr.bf16.mxu0 0
        %867 = vmatpush1.bf16.msra.mxu0 0
        %868 = vmatprep.mubr.bf16.mxu0 0
        %869 = vmatmul.mubr.bf16.gmra.mrb[0].mxu0 %v834
        %v870 = vpop.f32.mrb[0].mxu0
        %v871 = vadd.f32 0.0, %v870
        %v872 = vpop.f32.mrb[0].mxu0
        %v873 = vpop.f32.mrb[0].mxu0
        %v874 = vpop.f32.mrb[0].mxu0
        %875 = vdwg.mxu0
        %v876 = vadd.f32 %v830, %v871
        %v877 = vld [vmem:[#allocation2] sm:$0xff]
        %v878 = vxor.u32 %v876, 2147483648
        %v879 = vmul.f32 %v878, 1.442695
        %v880 = vpow.pop %v879
        %v881 = vadd.f32 %v880, 1.0
        %v882 = vrcp.pop %v881
        %v883 = vmul.f32 1.0, %v882
        %v884 = vtanh.pop %v876
        %886 = vrot.lane.b32.xlu0 %v877, 32
        %v887 = vpop.permute.xlu0 %886
        %v889 = vmul.f32 %v883, %v887
        %891 = vrot.lane.b32.xlu0 %v884, 32
        %v892 = vpop.permute.xlu0 %891
        %v894 = vmul.f32 %v883, %v892
        %896 = vrot.lane.b32.xlu0 %v894, 32
        %v897 = vpop.permute.xlu0 %896
        %v899 = vadd.f32 %v889, %v897
        %v900 = vtanh.pop %v899
        %902 = vrot.lane.b32.xlu0 %v900, 32
        %v903 = vpop.permute.xlu0 %902
        %v905 = vmul.f32 %v883, %v903
        %907 = vrot.lane.b32.xlu0 %v899, 96
        %v908 = vpop.permute.xlu0 %907
        %910 = vst.msk [vmem:[#allocation2] sm:$0xff] %vm437, %v908
        %v911 = vpack.c.bf16 %v905, %v905
        %v913 = vunpack.c.l.b16 %v911
        %v914 = vpack.c.b16 %v913, %v913
        %915 = vrot.lane.b32.xlu0 %v914, 64
        %v916 = vpop.permute.xlu0 %915
        %s918 = scalar_lea.vmem [#allocation3], 20
        %919 = vst.msk [vmem:[%s918] sm:$0xf] %vm446, %v916
        %s920 = scalar_lea.vmem %s366, 24 [#allocation5]
        %v921 = vld [vmem:[%s920] sm:$0xf]
        %v922 = vunpack.c.l.bf16 %v921
        %923 = vrot.lane.b32.xlu0 %v911, 64
        %v924 = vpop.permute.xlu0 %923
        %v926 = vsel %vm437, %v924, 0
        %928 = vmatprep.subr.bf16.mxu0 0
        %929 = vmatpush1.bf16.msra.mxu0 %v461
        %930 = vmatprep.subr.bf16.mxu0 0
        %931 = vmatpush1.bf16.msra.mxu0 %v462
        %932 = vmatprep.subr.bf16.mxu0 0
        %933 = vmatpush1.bf16.msra.mxu0 0
        %934 = vmatprep.subr.bf16.mxu0 0
        %935 = vmatpush1.bf16.msra.mxu0 0
        %936 = vmatprep.subr.bf16.mxu0 0
        %937 = vmatpush1.bf16.msra.mxu0 0
        %938 = vmatprep.subr.bf16.mxu0 0
        %939 = vmatpush1.bf16.msra.mxu0 0
        %940 = vmatprep.subr.bf16.mxu0 0
        %941 = vmatpush1.bf16.msra.mxu0 0
        %942 = vmatprep.subr.bf16.mxu0 0
        %943 = vmatpush1.bf16.msra.mxu0 0
        %944 = vmatprep.subr.bf16.mxu0 0
        %945 = vmatpush1.bf16.msra.mxu0 0
        %946 = vmatprep.subr.bf16.mxu0 0
        %947 = vmatpush1.bf16.msra.mxu0 0
        %948 = vmatprep.subr.bf16.mxu0 0
        %949 = vmatpush1.bf16.msra.mxu0 0
        %950 = vmatprep.subr.bf16.mxu0 0
        %951 = vmatpush1.bf16.msra.mxu0 0
        %952 = vmatprep.subr.bf16.mxu0 0
        %953 = vmatpush1.bf16.msra.mxu0 0
        %954 = vmatprep.subr.bf16.mxu0 0
        %955 = vmatpush1.bf16.msra.mxu0 0
        %956 = vmatprep.subr.bf16.mxu0 0
        %957 = vmatpush1.bf16.msra.mxu0 0
        %958 = vmatprep.subr.bf16.mxu0 0
        %959 = vmatpush1.bf16.msra.mxu0 0
        %960 = vmatprep.mubr.bf16.mxu0 0
        %961 = vmatmul.mubr.bf16.gmra.mrb[0].mxu0 %v926
        %v962 = vpop.f32.mrb[0].mxu0
        %v963 = vadd.f32 0.0, %v962
        %v964 = vpop.f32.mrb[0].mxu0
        %v965 = vpop.f32.mrb[0].mxu0
        %v966 = vpop.f32.mrb[0].mxu0
        %967 = vdwg.mxu0
        %v968 = vadd.f32 %v922, %v963
        %v969 = vld [vmem:[#allocation2] sm:$0xff]
        %v970 = vxor.u32 %v968, 2147483648
        %v971 = vmul.f32 %v970, 1.442695
        %v972 = vpow.pop %v971
        %v973 = vadd.f32 %v972, 1.0
        %v974 = vrcp.pop %v973
        %v975 = vmul.f32 1.0, %v974
        %v976 = vtanh.pop %v968
        %978 = vrot.lane.b32.xlu0 %v969, 32
        %v979 = vpop.permute.xlu0 %978
        %v981 = vmul.f32 %v975, %v979
        %983 = vrot.lane.b32.xlu0 %v976, 32
        %v984 = vpop.permute.xlu0 %983
        %v986 = vmul.f32 %v975, %v984
        %988 = vrot.lane.b32.xlu0 %v986, 32
        %v989 = vpop.permute.xlu0 %988
        %v991 = vadd.f32 %v981, %v989
        %v992 = vtanh.pop %v991
        %994 = vrot.lane.b32.xlu0 %v992, 32
        %v995 = vpop.permute.xlu0 %994
        %v997 = vmul.f32 %v975, %v995
        %999 = vrot.lane.b32.xlu0 %v991, 96
        %v1000 = vpop.permute.xlu0 %999
        %1002 = vst.msk [vmem:[#allocation2] sm:$0xff] %vm437, %v1000
        %v1003 = vpack.c.bf16 %v997, %v997
        %v1005 = vunpack.c.l.b16 %v1003
        %v1006 = vpack.c.b16 %v1005, %v1005
        %1007 = vrot.lane.b32.xlu0 %v1006, 64
        %v1008 = vpop.permute.xlu0 %1007
        %s1010 = scalar_lea.vmem [#allocation3], 24
        %1011 = vst.msk [vmem:[%s1010] sm:$0xf] %vm446, %v1008
        %s1012 = scalar_lea.vmem %s366, 28 [#allocation5]
        %v1013 = vld [vmem:[%s1012] sm:$0xf]
        %v1014 = vunpack.c.l.bf16 %v1013
        %1015 = vrot.lane.b32.xlu0 %v1003, 64
        %v1016 = vpop.permute.xlu0 %1015
        %v1018 = vsel %vm437, %v1016, 0
        %1020 = vmatprep.subr.bf16.mxu0 0
        %1021 = vmatpush1.bf16.msra.mxu0 %v461
        %1022 = vmatprep.subr.bf16.mxu0 0
        %1023 = vmatpush1.bf16.msra.mxu0 %v462
        %1024 = vmatprep.subr.bf16.mxu0 0
        %1025 = vmatpush1.bf16.msra.mxu0 0
        %1026 = vmatprep.subr.bf16.mxu0 0
        %1027 = vmatpush1.bf16.msra.mxu0 0
        %1028 = vmatprep.subr.bf16.mxu0 0
        %1029 = vmatpush1.bf16.msra.mxu0 0
        %1030 = vmatprep.subr.bf16.mxu0 0
        %1031 = vmatpush1.bf16.msra.mxu0 0
        %1032 = vmatprep.subr.bf16.mxu0 0
        %1033 = vmatpush1.bf16.msra.mxu0 0
        %1034 = vmatprep.subr.bf16.mxu0 0
        %1035 = vmatpush1.bf16.msra.mxu0 0
        %1036 = vmatprep.subr.bf16.mxu0 0
        %1037 = vmatpush1.bf16.msra.mxu0 0
        %1038 = vmatprep.subr.bf16.mxu0 0
        %1039 = vmatpush1.bf16.msra.mxu0 0
        %1040 = vmatprep.subr.bf16.mxu0 0
        %1041 = vmatpush1.bf16.msra.mxu0 0
        %1042 = vmatprep.subr.bf16.mxu0 0
        %1043 = vmatpush1.bf16.msra.mxu0 0
        %1044 = vmatprep.subr.bf16.mxu0 0
        %1045 = vmatpush1.bf16.msra.mxu0 0
        %1046 = vmatprep.subr.bf16.mxu0 0
        %1047 = vmatpush1.bf16.msra.mxu0 0
        %1048 = vmatprep.subr.bf16.mxu0 0
        %1049 = vmatpush1.bf16.msra.mxu0 0
        %1050 = vmatprep.subr.bf16.mxu0 0
        %1051 = vmatpush1.bf16.msra.mxu0 0
        %1052 = vmatprep.mubr.bf16.mxu0 0
        %1053 = vmatmul.mubr.bf16.gmra.mrb[0].mxu0 %v1018
        %v1054 = vpop.f32.mrb[0].mxu0
        %v1055 = vadd.f32 0.0, %v1054
        %v1056 = vpop.f32.mrb[0].mxu0
        %v1057 = vpop.f32.mrb[0].mxu0
        %v1058 = vpop.f32.mrb[0].mxu0
        %1059 = vdwg.mxu0
        %v1060 = vadd.f32 %v1014, %v1055
        %v1061 = vld [vmem:[#allocation2] sm:$0xff]
        %v1062 = vxor.u32 %v1060, 2147483648
        %v1063 = vmul.f32 %v1062, 1.442695
        %v1064 = vpow.pop %v1063
        %v1065 = vadd.f32 %v1064, 1.0
        %v1066 = vrcp.pop %v1065
        %v1067 = vmul.f32 1.0, %v1066
        %v1068 = vtanh.pop %v1060
        %1070 = vrot.lane.b32.xlu0 %v1061, 32
        %v1071 = vpop.permute.xlu0 %1070
        %v1073 = vmul.f32 %v1067, %v1071
        %1075 = vrot.lane.b32.xlu0 %v1068, 32
        %v1076 = vpop.permute.xlu0 %1075
        %v1078 = vmul.f32 %v1067, %v1076
        %1080 = vrot.lane.b32.xlu0 %v1078, 32
        %v1081 = vpop.permute.xlu0 %1080
        %v1083 = vadd.f32 %v1073, %v1081
        %v1084 = vtanh.pop %v1083
        %1086 = vrot.lane.b32.xlu0 %v1084, 32
        %v1087 = vpop.permute.xlu0 %1086
        %v1089 = vmul.f32 %v1067, %v1087
        %1091 = vrot.lane.b32.xlu0 %v1083, 96
        %v1092 = vpop.permute.xlu0 %1091
        %1094 = vst.msk [vmem:[#allocation2] sm:$0xff] %vm437, %v1092
        %v1095 = vpack.c.bf16 %v1089, %v1089
        %v1097 = vunpack.c.l.b16 %v1095
        %v1098 = vpack.c.b16 %v1097, %v1097
        %1099 = vrot.lane.b32.xlu0 %v1098, 64
        %v1100 = vpop.permute.xlu0 %1099
        %s1102 = scalar_lea.vmem [#allocation3], 28
        %1103 = vst.msk [vmem:[%s1102] sm:$0xf] %vm446, %v1100
        %v1104 = vld [vmem:[#allocation3] sm:$0xf]
        %v1105 = vld [vmem:[#allocation3 + $0x4] sm:$0xf]
        %v1106 = vld [vmem:[#allocation3 + $0x8] sm:$0xf]
        %v1107 = vld [vmem:[#allocation3 + $0xc] sm:$0xf]
        %v1108 = vld [vmem:[#allocation3 + $0x10] sm:$0xf]
        %v1109 = vld [vmem:[#allocation3 + $0x14] sm:$0xf]
        %v1110 = vld [vmem:[#allocation3 + $0x18] sm:$0xf]
        %v1111 = vld [vmem:[#allocation3 + $0x1c] sm:$0xf]
        %v1112 = vld [vmem:[%s3] sm:$0xf]
        %v1113 = vld [vmem:[%s3 + $0x4] sm:$0xf]
        %v1114 = vld [vmem:[%s3 + $0x8] sm:$0xf]
        %v1115 = vld [vmem:[%s3 + $0xc] sm:$0xf]
        %v1116 = vld [vmem:[#allocation4] sm:$0x1]
        %v1118 = vlaneseq
        %v1119 = vshrl.u32 %v1118, 7
        %v1120 = vsub.s32 0, %v1119
        %v1121 = vrot.slane %v1116, %v1120
        %1123 = vrot.lane.b32.xlu0 %v1095, 64
        %v1124 = vpop.permute.xlu0 %1123
        %v1129 = vunpack.c.l.b16 %v1112
        %v1130 = vunpack.c.l.b16 %v1113
        %v1131 = vunpack.c.l.b16 %v1114
        %v1132 = vunpack.c.l.b16 %v1115
        %v1133 = vpack.c.b16 %v1130, %v1129
        %v1134 = vpack.c.b16 %v1132, %v1131
        %v1138 = vsel %vm437, %v1124, 0
        %1140 = vmatprep.subr.bf16.mxu0 0
        %1141 = vmatpush1.bf16.msra.mxu0 %v1133
        %1142 = vmatprep.subr.bf16.mxu0 0
        %1143 = vmatpush1.bf16.msra.mxu0 %v1134
        %1144 = vmatprep.subr.bf16.mxu0 0
        %1145 = vmatpush1.bf16.msra.mxu0 0
        %1146 = vmatprep.subr.bf16.mxu0 0
        %1147 = vmatpush1.bf16.msra.mxu0 0
        %1148 = vmatprep.subr.bf16.mxu0 0
        %1149 = vmatpush1.bf16.msra.mxu0 0
        %1150 = vmatprep.subr.bf16.mxu0 0
        %1151 = vmatpush1.bf16.msra.mxu0 0
        %1152 = vmatprep.subr.bf16.mxu0 0
        %1153 = vmatpush1.bf16.msra.mxu0 0
        %1154 = vmatprep.subr.bf16.mxu0 0
        %1155 = vmatpush1.bf16.msra.mxu0 0
        %1156 = vmatprep.subr.bf16.mxu0 0
        %1157 = vmatpush1.bf16.msra.mxu0 0
        %1158 = vmatprep.subr.bf16.mxu0 0
        %1159 = vmatpush1.bf16.msra.mxu0 0
        %1160 = vmatprep.subr.bf16.mxu0 0
        %1161 = vmatpush1.bf16.msra.mxu0 0
        %1162 = vmatprep.subr.bf16.mxu0 0
        %1163 = vmatpush1.bf16.msra.mxu0 0
        %1164 = vmatprep.subr.bf16.mxu0 0
        %1165 = vmatpush1.bf16.msra.mxu0 0
        %1166 = vmatprep.subr.bf16.mxu0 0
        %1167 = vmatpush1.bf16.msra.mxu0 0
        %1168 = vmatprep.subr.bf16.mxu0 0
        %1169 = vmatpush1.bf16.msra.mxu0 0
        %1170 = vmatprep.subr.bf16.mxu0 0
        %1171 = vmatpush1.bf16.msra.mxu0 0
        %1172 = vmatprep.mubr.bf16.mxu0 0
        %1173 = vmatmul.mubr.bf16.gmra.mrb[0].mxu0 %v1138
        %v1174 = vpop.f32.mrb[0].mxu0
        %v1175 = vadd.f32 %v1121, %v1174
        %v1176 = vpop.f32.mrb[0].mxu0
        %v1177 = vpop.f32.mrb[0].mxu0
        %v1178 = vpop.f32.mrb[0].mxu0
        %1179 = vdwg.mxu0
        %v1180 = vld [vmem:[%s2] sm:$0xf]
        %v1181 = vld [vmem:[%s2 + $0x4] sm:$0xf]
        %v1182 = vld [vmem:[%s2 + $0x8] sm:$0xf]
        %v1183 = vld [vmem:[%s2 + $0xc] sm:$0xf]
        %v1192 = vunpack.c.l.b16 %v1104
        %v1193 = vunpack.c.l.b16 %v1105
        %v1194 = vunpack.c.l.b16 %v1106
        %v1195 = vunpack.c.l.b16 %v1107
        %v1196 = vunpack.c.l.b16 %v1108
        %v1197 = vunpack.c.l.b16 %v1109
        %v1198 = vunpack.c.l.b16 %v1110
        %v1199 = vunpack.c.l.b16 %v1111
        %v1200 = vpack.c.b16 %v1193, %v1192
        %v1201 = vpack.c.b16 %v1195, %v1194
        %v1202 = vpack.c.b16 %v1197, %v1196
        %v1203 = vpack.c.b16 %v1199, %v1198
        %v1208 = vunpack.c.l.b16 %v1180
        %v1209 = vunpack.c.l.b16 %v1181
        %v1210 = vunpack.c.l.b16 %v1182
        %v1211 = vunpack.c.l.b16 %v1183
        %v1212 = vpack.c.b16 %v1209, %v1208
        %v1213 = vpack.c.b16 %v1211, %v1210
        %v1217 = vsel %vm437, %v1200, 0
        %v1220 = vsel %vm437, %v1201, 0
        %v1223 = vsel %vm437, %v1202, 0
        %v1226 = vsel %vm437, %v1203, 0
        %1228 = vmatprep.subr.bf16.mxu0 0
        %1229 = vmatpush1.bf16.msra.mxu0 %v1212
        %1230 = vmatprep.subr.bf16.mxu0 0
        %1231 = vmatpush1.bf16.msra.mxu0 %v1213
        %1232 = vmatprep.subr.bf16.mxu0 0
        %1233 = vmatpush1.bf16.msra.mxu0 0
        %1234 = vmatprep.subr.bf16.mxu0 0
        %1235 = vmatpush1.bf16.msra.mxu0 0
        %1236 = vmatprep.subr.bf16.mxu0 0
        %1237 = vmatpush1.bf16.msra.mxu0 0
        %1238 = vmatprep.subr.bf16.mxu0 0
        %1239 = vmatpush1.bf16.msra.mxu0 0
        %1240 = vmatprep.subr.bf16.mxu0 0
        %1241 = vmatpush1.bf16.msra.mxu0 0
        %1242 = vmatprep.subr.bf16.mxu0 0
        %1243 = vmatpush1.bf16.msra.mxu0 0
        %1244 = vmatprep.subr.bf16.mxu0 0
        %1245 = vmatpush1.bf16.msra.mxu0 0
        %1246 = vmatprep.subr.bf16.mxu0 0
        %1247 = vmatpush1.bf16.msra.mxu0 0
        %1248 = vmatprep.subr.bf16.mxu0 0
        %1249 = vmatpush1.bf16.msra.mxu0 0
        %1250 = vmatprep.subr.bf16.mxu0 0
        %1251 = vmatpush1.bf16.msra.mxu0 0
        %1252 = vmatprep.subr.bf16.mxu0 0
        %1253 = vmatpush1.bf16.msra.mxu0 0
        %1254 = vmatprep.subr.bf16.mxu0 0
        %1255 = vmatpush1.bf16.msra.mxu0 0
        %1256 = vmatprep.subr.bf16.mxu0 0
        %1257 = vmatpush1.bf16.msra.mxu0 0
        %1258 = vmatprep.subr.bf16.mxu0 0
        %1259 = vmatpush1.bf16.msra.mxu0 0
        %1260 = vmatprep.mubr.bf16.mxu0 0
        %1261 = vmatmul.mubr.bf16.gmra.mrb[0].mxu0 %v1217
        %v1262 = vpop.f32.mrb[0].mxu0
        %v1263 = vadd.f32 0.0, %v1262
        %v1264 = vpop.f32.mrb[0].mxu0
        %v1265 = vpop.f32.mrb[0].mxu0
        %v1266 = vadd.f32 0.0, %v1265
        %v1267 = vpop.f32.mrb[0].mxu0
        %1268 = vmatprep.mubr.bf16.mxu0 0
        %1269 = vmatmul.mubr.bf16.gmra.mrb[0].mxu0 %v1220
        %v1270 = vpop.f32.mrb[0].mxu0
        %v1271 = vadd.f32 0.0, %v1270
        %v1272 = vpop.f32.mrb[0].mxu0
        %v1273 = vpop.f32.mrb[0].mxu0
        %v1274 = vadd.f32 0.0, %v1273
        %v1275 = vpop.f32.mrb[0].mxu0
        %1276 = vmatprep.mubr.bf16.mxu0 0
        %1277 = vmatmul.mubr.bf16.gmra.mrb[0].mxu0 %v1223
        %v1278 = vpop.f32.mrb[0].mxu0
        %v1279 = vadd.f32 0.0, %v1278
        %v1280 = vpop.f32.mrb[0].mxu0
        %v1281 = vpop.f32.mrb[0].mxu0
        %v1282 = vadd.f32 0.0, %v1281
        %v1283 = vpop.f32.mrb[0].mxu0
        %1284 = vmatprep.mubr.bf16.mxu0 0
        %1285 = vmatmul.mubr.bf16.gmra.mrb[0].mxu0 %v1226
        %v1286 = vpop.f32.mrb[0].mxu0
        %v1287 = vadd.f32 0.0, %v1286
        %v1288 = vpop.f32.mrb[0].mxu0
        %v1289 = vpop.f32.mrb[0].mxu0
        %v1290 = vadd.f32 0.0, %v1289
        %v1291 = vpop.f32.mrb[0].mxu0
        %1292 = vdwg.mxu0
        %v1293 = vadd.f32 %v1263, %v1175
        %v1294 = vadd.f32 %v1266, %v1175
        %v1295 = vadd.f32 %v1271, %v1175
        %v1296 = vadd.f32 %v1274, %v1175
        %v1297 = vadd.f32 %v1279, %v1175
        %v1298 = vadd.f32 %v1282, %v1175
        %v1299 = vadd.f32 %v1287, %v1175
        %v1300 = vadd.f32 %v1290, %v1175
        %vm1301 = vcmask 7168
        %v1302 = vsel %vm1301, %v1293, -inf
        %v1303 = vsel %vm1301, %v1294, -inf
        %v1304 = vsel %vm1301, %v1295, -inf
        %v1305 = vsel %vm1301, %v1296, -inf
        %v1306 = vsel %vm1301, %v1297, -inf
        %v1307 = vmax.f32 %v1302, %v1306
        %v1308 = vsel %vm1301, %v1298, -inf
        %v1309 = vmax.f32 %v1303, %v1308
        %v1310 = vsel %vm1301, %v1299, -inf
        %v1311 = vmax.f32 %v1304, %v1310
        %v1312 = vsel %vm1301, %v1300, -inf
        %v1313 = vmax.f32 %v1305, %v1312
        %v1314 = vmax.f32 %v1307, %v1309
        %v1315 = vmax.f32 %v1311, %v1313
        %v1316 = vmax.f32 %v1314, %v1315
        %v1317 = vsub.f32 %v1293, %v1316
        %v1318 = vsub.f32 %v1294, %v1316
        %v1319 = vsub.f32 %v1295, %v1316
        %v1320 = vsub.f32 %v1296, %v1316
        %v1321 = vsub.f32 %v1297, %v1316
        %v1322 = vsub.f32 %v1298, %v1316
        %v1323 = vsub.f32 %v1299, %v1316
        %v1324 = vsub.f32 %v1300, %v1316
        %v1325 = vmul.f32 %v1317, 1.442695
        %v1326 = vpow.pop %v1325
        %v1327 = vmul.f32 %v1318, 1.442695
        %v1328 = vpow.pop %v1327
        %v1329 = vmul.f32 %v1319, 1.442695
        %v1330 = vpow.pop %v1329
        %v1331 = vmul.f32 %v1320, 1.442695
        %v1332 = vpow.pop %v1331
        %v1333 = vmul.f32 %v1321, 1.442695
        %v1334 = vpow.pop %v1333
        %v1335 = vmul.f32 %v1322, 1.442695
        %v1336 = vpow.pop %v1335
        %v1337 = vmul.f32 %v1323, 1.442695
        %v1338 = vpow.pop %v1337
        %v1339 = vmul.f32 %v1324, 1.442695
        %v1340 = vpow.pop %v1339
        %v1341 = vsel %vm1301, %v1326, 0.0
        %v1342 = vsel %vm1301, %v1328, 0.0
        %v1343 = vadd.f32 %v1341, %v1342
        %v1344 = vsel %vm1301, %v1330, 0.0
        %v1345 = vadd.f32 %v1343, %v1344
        %v1346 = vsel %vm1301, %v1332, 0.0
        %v1347 = vadd.f32 %v1345, %v1346
        %v1348 = vsel %vm1301, %v1334, 0.0
        %v1349 = vadd.f32 %v1347, %v1348
        %v1350 = vsel %vm1301, %v1336, 0.0
        %v1351 = vadd.f32 %v1349, %v1350
        %v1352 = vsel %vm1301, %v1338, 0.0
        %v1353 = vadd.f32 %v1351, %v1352
        %v1354 = vsel %vm1301, %v1340, 0.0
        %v1355 = vadd.f32 %v1353, %v1354
        %v1356 = vrcp.pop %v1355
        %v1357 = vmul.f32 %v1326, %v1356
        %v1358 = vmul.f32 %v1328, %v1356
        %v1359 = vmul.f32 %v1330, %v1356
        %v1360 = vmul.f32 %v1332, %v1356
        %v1361 = vmul.f32 %v1334, %v1356
        %v1362 = vmul.f32 %v1336, %v1356
        %v1363 = vmul.f32 %v1338, %v1356
        %v1364 = vmul.f32 %v1340, %v1356
        %v1365 = vunpack.c.l.bf16 %v1104
        %v1366 = vunpack.c.l.bf16 %v1105
        %v1367 = vunpack.c.l.bf16 %v1106
        %v1368 = vunpack.c.l.bf16 %v1107
        %v1369 = vunpack.c.l.bf16 %v1108
        %v1370 = vunpack.c.l.bf16 %v1109
        %v1371 = vunpack.c.l.bf16 %v1110
        %v1372 = vunpack.c.l.bf16 %v1111
        %1374 = vset.pattern.permute.xlu0 0
        %1375 = vperm.xlu0 %1374, %v1357
        %v1376 = vpop.permute.xlu0 %1375
        %1379 = vset.pattern.permute.xlu0 0
        %1380 = vperm.xlu0 %1379, %v1358
        %v1381 = vpop.permute.xlu0 %1380
        %1384 = vset.pattern.permute.xlu0 0
        %1385 = vperm.xlu0 %1384, %v1359
        %v1386 = vpop.permute.xlu0 %1385
        %1389 = vset.pattern.permute.xlu0 0
        %1390 = vperm.xlu0 %1389, %v1360
        %v1391 = vpop.permute.xlu0 %1390
        %1394 = vset.pattern.permute.xlu0 0
        %1395 = vperm.xlu0 %1394, %v1361
        %v1396 = vpop.permute.xlu0 %1395
        %1399 = vset.pattern.permute.xlu0 0
        %1400 = vperm.xlu0 %1399, %v1362
        %v1401 = vpop.permute.xlu0 %1400
        %1404 = vset.pattern.permute.xlu0 0
        %1405 = vperm.xlu0 %1404, %v1363
        %v1406 = vpop.permute.xlu0 %1405
        %1409 = vset.pattern.permute.xlu0 0
        %1410 = vperm.xlu0 %1409, %v1364
        %v1411 = vpop.permute.xlu0 %1410
        %v1413 = vmul.f32 %v1376, %v1365
        %v1414 = vmul.f32 %v1381, %v1366
        %v1415 = vmul.f32 %v1386, %v1367
        %v1416 = vmul.f32 %v1391, %v1368
        %v1417 = vmul.f32 %v1396, %v1369
        %v1418 = vmul.f32 %v1401, %v1370
        %v1419 = vmul.f32 %v1406, %v1371
        %v1420 = vmul.f32 %v1411, %v1372
        %v1421 = vsel %vm437, %v1413, 0.0
        %v1422 = vsel %vm437, %v1414, 0.0
        %v1423 = vadd.f32 %v1421, %v1422
        %v1424 = vsel %vm437, %v1415, 0.0
        %v1425 = vadd.f32 %v1423, %v1424
        %v1426 = vsel %vm437, %v1416, 0.0
        %v1427 = vadd.f32 %v1425, %v1426
        %v1428 = vsel %vm437, %v1417, 0.0
        %v1429 = vadd.f32 %v1427, %v1428
        %v1430 = vsel %vm437, %v1418, 0.0
        %v1431 = vadd.f32 %v1429, %v1430
        %v1432 = vsel %vm437, %v1419, 0.0
        %v1433 = vadd.f32 %v1431, %v1432
        %v1434 = vsel %vm437, %v1420, 0.0
        %v1435 = vadd.f32 %v1433, %v1434
        %v1436 = vpack.c.bf16 %v1435, %v1435
        %v1437 = vld [vmem:[%s5] sm:$0xff]
        %v1438 = vld [vmem:[%s5 + $0x8] sm:$0xff]
        %v1439 = vld [vmem:[%s5 + $0x10] sm:$0xff]
        %v1440 = vld [vmem:[%s5 + $0x18] sm:$0xff]
        %v1441 = vld [vmem:[%s6] sm:$0x3]
        %v1443 = vlaneseq
        %v1444 = vshrl.u32 %v1443, 7
        %v1445 = vsub.s32 0, %v1444
        %v1446 = vrot.slane %v1441, %v1445
        %v1447 = vlaneseq
        %v1448 = vshrl.u32 %v1447, 7
        %v1449 = vsub.s32 1, %v1448
        %v1450 = vrot.slane %v1441, %v1449
        %v1457 = vunpack.c.l.b16 %v1437
        %v1458 = vunpack.c.h.b16 %v1437
        %v1459 = vunpack.c.l.b16 %v1438
        %v1460 = vunpack.c.h.b16 %v1438
        %v1461 = vunpack.c.l.b16 %v1439
        %v1462 = vunpack.c.h.b16 %v1439
        %v1463 = vunpack.c.l.b16 %v1440
        %v1464 = vunpack.c.h.b16 %v1440
        %v1465 = vpack.c.b16 %v1459, %v1457
        %v1466 = vpack.c.b16 %v1460, %v1458
        %v1467 = vpack.c.b16 %v1463, %v1461
        %v1468 = vpack.c.b16 %v1464, %v1462
        %v1474 = vsel %vm437, %v1436, 0
        %1476 = vmatprep.subr.bf16.mxu0 %v1466
        %1477 = vmatpush1.bf16.msra.mxu0 %v1465
        %1478 = vmatprep.subr.bf16.mxu0 %v1468
        %1479 = vmatpush1.bf16.msra.mxu0 %v1467
        %1480 = vmatprep.subr.bf16.mxu0 0
        %1481 = vmatpush1.bf16.msra.mxu0 0
        %1482 = vmatprep.subr.bf16.mxu0 0
        %1483 = vmatpush1.bf16.msra.mxu0 0
        %1484 = vmatprep.subr.bf16.mxu0 0
        %1485 = vmatpush1.bf16.msra.mxu0 0
        %1486 = vmatprep.subr.bf16.mxu0 0
        %1487 = vmatpush1.bf16.msra.mxu0 0
        %1488 = vmatprep.subr.bf16.mxu0 0
        %1489 = vmatpush1.bf16.msra.mxu0 0
        %1490 = vmatprep.subr.bf16.mxu0 0
        %1491 = vmatpush1.bf16.msra.mxu0 0
        %1492 = vmatprep.subr.bf16.mxu0 0
        %1493 = vmatpush1.bf16.msra.mxu0 0
        %1494 = vmatprep.subr.bf16.mxu0 0
        %1495 = vmatpush1.bf16.msra.mxu0 0
        %1496 = vmatprep.subr.bf16.mxu0 0
        %1497 = vmatpush1.bf16.msra.mxu0 0
        %1498 = vmatprep.subr.bf16.mxu0 0
        %1499 = vmatpush1.bf16.msra.mxu0 0
        %1500 = vmatprep.subr.bf16.mxu0 0
        %1501 = vmatpush1.bf16.msra.mxu0 0
        %1502 = vmatprep.subr.bf16.mxu0 0
        %1503 = vmatpush1.bf16.msra.mxu0 0
        %1504 = vmatprep.subr.bf16.mxu0 0
        %1505 = vmatpush1.bf16.msra.mxu0 0
        %1506 = vmatprep.subr.bf16.mxu0 0
        %1507 = vmatpush1.bf16.msra.mxu0 0
        %1508 = vmatprep.mubr.bf16.mxu0 0
        %1509 = vmatmul.mubr.bf16.gmra.mrb[0].mxu0 %v1474
        %v1510 = vpop.f32.mrb[0].mxu0
        %v1511 = vadd.f32 %v1446, %v1510
        %v1512 = vpop.f32.mrb[0].mxu0
        %v1513 = vadd.f32 %v1450, %v1512
        %v1514 = vpop.f32.mrb[0].mxu0
        %v1515 = vpop.f32.mrb[0].mxu0
        %1516 = vdwg.mxu0
        %v1517 = vpack.c.bf16 %v1511, %v1511
        %v1518 = vpack.c.bf16 %v1513, %v1513
        %v1519 = vld [vmem:[%s7] sm:$0xf]
        %v1520 = vld [vmem:[%s7 + $0x4] sm:$0xf]
        %v1521 = vld [vmem:[%s7 + $0x8] sm:$0xf]
        %v1522 = vld [vmem:[%s7 + $0xc] sm:$0xf]
        %v1523 = vld [vmem:[%s7 + $0x10] sm:$0xf]
        %v1524 = vld [vmem:[%s7 + $0x14] sm:$0xf]
        %v1525 = vld [vmem:[%s7 + $0x18] sm:$0xf]
        %v1526 = vld [vmem:[%s7 + $0x1c] sm:$0xf]
        %v1527 = vld [vmem:[%s7 + $0x20] sm:$0xf]
        %v1528 = vld [vmem:[%s7 + $0x24] sm:$0xf]
        %v1529 = vld [vmem:[%s7 + $0x28] sm:$0xf]
        %v1530 = vld [vmem:[%s7 + $0x2c] sm:$0xf]
        %v1531 = vld [vmem:[%s7 + $0x30] sm:$0xf]
        %v1532 = vld [vmem:[%s7 + $0x34] sm:$0xf]
        %v1533 = vld [vmem:[%s7 + $0x38] sm:$0xf]
        %v1534 = vld [vmem:[%s7 + $0x3c] sm:$0xf]
        %v1535 = vld [vmem:[%s7 + $0x40] sm:$0xf]
        %v1536 = vld [vmem:[%s7 + $0x44] sm:$0xf]
        %v1537 = vld [vmem:[%s7 + $0x48] sm:$0xf]
        %v1538 = vld [vmem:[%s7 + $0x4c] sm:$0xf]
        %v1539 = vld [vmem:[%s7 + $0x50] sm:$0xf]
        %v1540 = vld [vmem:[%s7 + $0x54] sm:$0xf]
        %v1541 = vld [vmem:[%s7 + $0x58] sm:$0xf]
        %v1542 = vld [vmem:[%s7 + $0x5c] sm:$0xf]
        %v1543 = vld [vmem:[%s7 + $0x60] sm:$0xf]
        %v1544 = vld [vmem:[%s8] sm:$0x1]
        %v1546 = vlaneseq
        %v1547 = vshrl.u32 %v1546, 7
        %v1548 = vsub.s32 0, %v1547
        %v1549 = vrot.slane %v1544, %v1548
        %v1576 = vunpack.c.l.b16 %v1519
        %v1577 = vunpack.c.l.b16 %v1520
        %v1578 = vunpack.c.l.b16 %v1521
        %v1579 = vunpack.c.l.b16 %v1522
        %v1580 = vunpack.c.l.b16 %v1523
        %v1581 = vunpack.c.l.b16 %v1524
        %v1582 = vunpack.c.l.b16 %v1525
        %v1583 = vunpack.c.l.b16 %v1526
        %v1584 = vunpack.c.l.b16 %v1527
        %v1585 = vunpack.c.l.b16 %v1528
        %v1586 = vunpack.c.l.b16 %v1529
        %v1587 = vunpack.c.l.b16 %v1530
        %v1588 = vunpack.c.l.b16 %v1531
        %v1589 = vunpack.c.l.b16 %v1532
        %v1590 = vunpack.c.l.b16 %v1533
        %v1591 = vunpack.c.l.b16 %v1534
        %v1592 = vunpack.c.l.b16 %v1535
        %v1593 = vunpack.c.l.b16 %v1536
        %v1594 = vunpack.c.l.b16 %v1537
        %v1595 = vunpack.c.l.b16 %v1538
        %v1596 = vunpack.c.l.b16 %v1539
        %v1597 = vunpack.c.l.b16 %v1540
        %v1598 = vunpack.c.l.b16 %v1541
        %v1599 = vunpack.c.l.b16 %v1542
        %v1600 = vunpack.c.l.b16 %v1543
        %v1601 = vpack.c.b16 %v1577, %v1576
        %v1602 = vpack.c.b16 %v1579, %v1578
        %v1603 = vpack.c.b16 %v1581, %v1580
        %v1604 = vpack.c.b16 %v1583, %v1582
        %v1605 = vpack.c.b16 %v1585, %v1584
        %v1606 = vpack.c.b16 %v1587, %v1586
        %v1607 = vpack.c.b16 %v1589, %v1588
        %v1608 = vpack.c.b16 %v1591, %v1590
        %v1609 = vpack.c.b16 %v1593, %v1592
        %v1610 = vpack.c.b16 %v1595, %v1594
        %v1611 = vpack.c.b16 %v1597, %v1596
        %v1612 = vpack.c.b16 %v1599, %v1598
        %v1613 = vpack.c.b16 %v1600, %v1600
        %vm1626 = vcmask 588800
        %v1628 = vsel %vm1626, %v1518, 0
        %vm1630 = vcmask 1043456
        %v1632 = vsel %vm1630, %v1613, 0
        %1634 = vmatprep.subr.bf16.mxu0 0
        %1635 = vmatpush1.bf16.msra.mxu0 %v1601
        %1636 = vmatprep.subr.bf16.mxu0 0
        %1637 = vmatpush1.bf16.msra.mxu0 %v1602
        %1638 = vmatprep.subr.bf16.mxu0 0
        %1639 = vmatpush1.bf16.msra.mxu0 %v1603
        %1640 = vmatprep.subr.bf16.mxu0 0
        %1641 = vmatpush1.bf16.msra.mxu0 %v1604
        %1642 = vmatprep.subr.bf16.mxu0 0
        %1643 = vmatpush1.bf16.msra.mxu0 %v1605
        %1644 = vmatprep.subr.bf16.mxu0 0
        %1645 = vmatpush1.bf16.msra.mxu0 %v1606
        %1646 = vmatprep.subr.bf16.mxu0 0
        %1647 = vmatpush1.bf16.msra.mxu0 %v1607
        %1648 = vmatprep.subr.bf16.mxu0 0
        %1649 = vmatpush1.bf16.msra.mxu0 %v1608
        %1650 = vmatprep.subr.bf16.mxu0 0
        %1651 = vmatpush1.bf16.msra.mxu0 %v1609
        %1652 = vmatprep.subr.bf16.mxu0 0
        %1653 = vmatpush1.bf16.msra.mxu0 %v1610
        %1654 = vmatprep.subr.bf16.mxu0 0
        %1655 = vmatpush1.bf16.msra.mxu0 %v1611
        %1656 = vmatprep.subr.bf16.mxu0 0
        %1657 = vmatpush1.bf16.msra.mxu0 %v1612
        %1658 = vmatprep.subr.bf16.mxu0 0
        %1659 = vmatpush1.bf16.msra.mxu0 %v1632
        %1660 = vmatprep.subr.bf16.mxu0 0
        %1661 = vmatpush1.bf16.msra.mxu0 0
        %1662 = vmatprep.subr.bf16.mxu0 0
        %1663 = vmatpush1.bf16.msra.mxu0 0
        %1664 = vmatprep.subr.bf16.mxu0 0
        %1665 = vmatpush1.bf16.msra.mxu0 0
        %1666 = vmatprep.mubr.bf16.mxu0 %v1628
        %1667 = vmatmul.mubr.bf16.gmra.mrb[0].mxu0 %v1517
        %v1668 = vpop.f32.mrb[0].mxu0
        %v1669 = vadd.f32 %v1549, %v1668
        %v1670 = vpop.f32.mrb[0].mxu0
        %v1671 = vpop.f32.mrb[0].mxu0
        %v1672 = vpop.f32.mrb[0].mxu0
        %1673 = vdwg.mxu0
        %v1674 = vxor.u32 %v1669, 2147483648
        %v1675 = vmul.f32 %v1674, 1.442695
        %v1676 = vpow.pop %v1675
        %v1677 = vadd.f32 %v1676, 1.0
        %v1678 = vrcp.pop %v1677
        %v1679 = vmul.f32 1.0, %v1678
        %vm1680 = vcmask 64512
        %1681 = vst.msk [vmem:[%s401] sm:$0xff] %vm1680, %v1679
        %p1682 = scmp.lt.s32.totalorder %s22, 1
        %s1683 = scalar_select %p1682, %s22, 1
        %s1684 = smul.addr %s1683, 8
        %s1685 = scalar_lea.vmem %s9, %s1684
        // Predicated region
        $region98: #{tpu_custom_call.1} parent=92 // pred_check
          %p1686 = pneg %p234
        $region99: #{tpu_custom_call.1} parent=92 // pred_check_branch
          %1688 = sbr.rel (%p1686) target = $region101
        $region100: #{tpu_custom_call.1} parent=92 // pred_region
          _
        $region101: #{tpu_custom_call.1} parent=92 // pred_fallthru
          _
      $region93: #{tpu_custom_call.1} parent=5 // pred_fallthru
        _
      %p1689 = scmp.le.s32.totalorder 2, %s17
      // Predicated region
      $region102: #{tpu_custom_call.1} parent=5 // pred_check
        %p1690 = pneg %p1689
      $region103: #{tpu_custom_call.1} parent=5 // pred_check_branch
        %1692 = sbr.rel (%p1690) target = $region105
      $region104: #{tpu_custom_call.1} parent=5 // pred_region
        %s1693 = ssub.s32 %s17, 2
        // Predicated region
        $region106: #{tpu_custom_call.1} parent=104 // pred_check
          %p1694 = pneg %p240
        $region107: #{tpu_custom_call.1} parent=104 // pred_check_branch
          %1696 = sbr.rel (%p1694) target = $region109
        $region108: #{tpu_custom_call.1} parent=104 // pred_region
          %p1697 = scmp.lt.s32.totalorder %s23, 1
          %s1698 = scalar_select %p1697, %s23, 1
          %s1699 = smul.addr %s1698, 8
          %s1700 = scalar_lea.vmem %s9, %s1699
        $region109: #{tpu_custom_call.1} parent=104 // pred_fallthru
          _
      $region105: #{tpu_custom_call.1} parent=5 // pred_fallthru
        _
    $region6: #{tpu_custom_call.1} parent=1 // loop_footer
      %s21 = sadd.s32 1, %s17
    $region7: #{tpu_custom_call.1} parent=1 // loop_footer_branch
      %16 = sbr.rel target = $region3
    $region8: #{tpu_custom_call.1} parent=1 // loop_exit
      _

</llo_original>
